<compile_context>
chip_gen: v7x
topology: tpu7x:2x2x1
jax: 0.10.0
libtpu: 0.0.40
codegen_flags: <defaults>
</compile_context>

<pallas_src>
import math

import jax
import jax.numpy as jnp
from jax import lax
from jax.experimental import pallas as pl
from jax.experimental.pallas import tpu as pltpu


# ----------------------------- kernel helpers -------------------------------

def _standardize(x):
    # per-last-dim, unbiased std (matches torch .std() default), no eps.
    n = x.shape[-1]
    mean = jnp.mean(x, axis=-1, keepdims=True)
    mean_sq = jnp.mean(x * x, axis=-1, keepdims=True)
    var = (mean_sq - mean * mean) * (n / (n - 1.0))
    var = jnp.maximum(var, 0.0)  # guard tiny negatives from cancellation
    return (x - mean) * lax.rsqrt(var)


def _leaky(x):  # nn.LeakyReLU default negative_slope = 0.01
    return jnp.where(x > 0, x, 0.01 * x)


def _relu(x):
    return jnp.maximum(x, 0.0)


def _mxu(x, w):
    # bf16 operands (native MXU dtype), f32 accumulation.
    return jnp.dot(x.astype(jnp.bfloat16), w.astype(jnp.bfloat16),
                   preferred_element_type=jnp.float32)


# --------------------------------- kernel -----------------------------------

def simulator_kernel(
    # scalar prefetch (SMEM, whole array)
    utt_ref,                                   # (B*L,) int32 token ids
    # batched activations (VMEM blocks of tile_b rows)
    spk_emb_ref, sep_img_ref, vis_ctx_ref, mask_ref,
    # weights (whole arrays, VMEM resident)
    emb_tbl_ref,
    w_e2h_ref, b_e2h_ref,
    w_c1_ref, b_c1_ref, w_c2_ref, b_c2_ref,
    w_mm_ref, b_mm_ref,
    w_a1_ref, b_a1_ref, w_a2_ref, b_a2_ref,
    w_sep_ref, b_sep_ref,
    # output
    out_ref,                                   # (tile_b, NIMG) f32
    # scratch
    reps_ref,                                  # (tile_b*L, E) f32
):
    TB, L = mask_ref.shape
    NIMG, D = sep_img_ref.shape[1], sep_img_ref.shape[2]
    H = w_e2h_ref.shape[1]
    A = w_a1_ref.shape[1]
    N = TB * L

    # ----- embedding row gather (SMEM ids -> VMEM table rows -> scratch) -----
    base = pl.program_id(0) * N

    def gather_body(t, carry):
        tok = utt_ref[base + t]
        reps_ref[pl.ds(t, 1), :] = emb_tbl_ref[pl.ds(tok, 1), :]
        return carry

    lax.fori_loop(0, N, gather_body, 0, unroll=True)

    # ----- standardize raw inputs (matches forward()) -----
    vis_ctx = _standardize(vis_ctx_ref[...])                       # (TB, 6D)
    spk_emb = _standardize(spk_emb_ref[...])                       # (TB, E)
    sep2d = _standardize(sep_img_ref[...].reshape(TB * NIMG, D))   # (TB*6, D)

    # ----- lin_context: Linear(6D,H)+LReLU -> Linear(H,H)+LReLU -----
    pc = _leaky(_mxu(vis_ctx, w_c1_ref[...]) + b_c1_ref[...])
    pc = _leaky(_mxu(pc, w_c2_ref[...]) + b_c2_ref[...])
    pc = _standardize(pc)                                          # (TB, H)

    # ----- utterance branch (kept 2-D, rows = (b, l) b-major) -----
    reps = reps_ref[...]                                           # (N, E)
    input_reps = _standardize(
        _leaky(_mxu(reps, w_e2h_ref[...]) + b_e2h_ref[...]))       # (N, H)

    pc_rows = jnp.broadcast_to(pc[:, None, :], (TB, L, H)).reshape(N, H)
    mm = input_reps * pc_rows
    mm_reps = _relu(_mxu(mm, w_mm_ref[...]) + b_mm_ref[...])       # (N, H)

    # attention: Linear(H,A)+LReLU -> standardize -> dot with w_a2 (lane reduce)
    att_h = _standardize(
        _leaky(_mxu(mm_reps, w_a1_ref[...]) + b_a1_ref[...]))      # (N, A)
    w_a2_b = w_a2_ref[...].reshape(1, 1, A)                        # (1,1,A)
    logits = jnp.sum(att_h.reshape(TB, L, A) * w_a2_b, axis=-1)    # (TB, L)
    logits = logits + b_a2_ref[...]                                # (TB, L)

    # mask fill (large finite negative) + lane-axis softmax over L
    pad = mask_ref[...] != 0                                       # (TB, L)
    logits = jnp.where(pad, -1e30, logits)
    logits = logits - jnp.max(logits, axis=-1, keepdims=True)
    e = jnp.exp(logits)
    att_w = e / jnp.sum(e, axis=-1, keepdims=True)                 # (TB, L)

    utt_out = jnp.sum(mm_reps.reshape(TB, L, H) * att_w[:, :, None],
                      axis=1)                                      # (TB, H)

    # ----- embeds branch -----
    er = _standardize(_leaky(_mxu(spk_emb, w_e2h_ref[...]) + b_e2h_ref[...]))
    em = _relu(_mxu(er * pc, w_mm_ref[...]) + b_mm_ref[...])
    embeds_out = _standardize(em)                                  # (TB, H)

    # ----- separate images branch -----
    sep_h = _standardize(
        _relu(_mxu(sep2d, w_sep_ref[...]) + b_sep_ref[...]))       # (TB*6, H)

    # ----- final bmm: (TB,6,H) x (TB,H) -> (TB,6) -----
    embeds = utt_out * embeds_out                                  # (TB, H)
    out_ref[...] = jnp.sum(sep_h.reshape(TB, NIMG, H) * embeds[:, None, :],
                           axis=-1)


# ------------------------------- wrapper -------------------------------------

def simulator_forward(params, speaker_embeds, speaker_utterances,
                      separate_images, visual_context, masks, *, tile_b=None):
    B, L = speaker_utterances.shape
    n_img = separate_images.shape[1]
    E = params["emb_table"].shape[1]

    if tile_b is None:
        tile_b = B if B <= 128 else 128
    assert B % tile_b == 0, "batch must be divisible by tile_b"
    grid = (B // tile_b,)

    utt_flat = speaker_utterances.reshape(B * L).astype(jnp.int32)
    masks2d = masks.reshape(B, L).astype(jnp.int32)

    weight_args = (
        params["emb_table"],
        params["w_e2h"], params["b_e2h"],
        params["w_c1"], params["b_c1"], params["w_c2"], params["b_c2"],
        params["w_mm"], params["b_mm"],
        params["w_a1"], params["b_a1"], params["w_a2"], params["b_a2"],
        params["w_sep"], params["b_sep"],
    )

    def batch_spec(shape):
        block = (tile_b,) + tuple(shape[1:])
        nrest = len(shape) - 1
        return pl.BlockSpec(block, lambda i, *_: (i,) + (0,) * nrest)

    def whole_spec(shape):
        nd = len(shape)
        return pl.BlockSpec(tuple(shape), lambda i, *_: (0,) * nd)

    in_specs = [
        batch_spec(speaker_embeds.shape),
        batch_spec(separate_images.shape),
        batch_spec(visual_context.shape),
        batch_spec(masks2d.shape),
    ] + [whole_spec(w.shape) for w in weight_args]

    out_specs = pl.BlockSpec((tile_b, n_img), lambda i, *_: (i, 0))

    grid_spec = pltpu.PrefetchScalarGridSpec(
        num_scalar_prefetch=1,
        grid=grid,
        in_specs=in_specs,
        out_specs=out_specs,
        scratch_shapes=[pltpu.VMEM((tile_b * L, E), jnp.float32)],
    )

    out2d = pl.pallas_call(
        simulator_kernel,
        grid_spec=grid_spec,
        out_shape=jax.ShapeDtypeStruct((B, n_img), jnp.float32),
        compiler_params=pltpu.CompilerParams(
            dimension_semantics=("parallel",),
            vmem_limit_bytes=32 * 1024 * 1024,
        ),
    )(utt_flat, speaker_embeds, separate_images, visual_context, masks2d,
      *weight_args)

    # match torch: bmm output is (B, 6, 1)
    return out2d.reshape(B, n_img, 1)


# --------------------------- parameter init ----------------------------------

def _xavier_uniform(key, shape, fan_in, fan_out):
    bound = math.sqrt(6.0 / (fan_in + fan_out))
    return jax.random.uniform(key, shape, jnp.float32, -bound, bound)


def _bias(key, fan_in, fan_out):
    bound = 1.0 / math.sqrt(fan_in)
    return jax.random.uniform(key, (1, fan_out), jnp.float32, -bound, bound)


def init_params(key, vocab_size, embedding_dim, hidden_dim, img_dim, att_dim):
    keys = jax.random.split(key, 16)
    p = {}
    # nn.Embedding + xavier (xavier overwrites the padding row, as in torch code)
    p["emb_table"] = _xavier_uniform(keys[0], (vocab_size, embedding_dim),
                                     vocab_size, embedding_dim)
    # lin_emb2hid: Linear(E, H)
    p["w_e2h"] = _xavier_uniform(keys[1], (embedding_dim, hidden_dim),
                                 embedding_dim, hidden_dim)
    p["b_e2h"] = _bias(keys[2], embedding_dim, hidden_dim)
    # lin_context: Linear(6D, H), Linear(H, H)
    p["w_c1"] = _xavier_uniform(keys[3], (img_dim * 6, hidden_dim),
                                img_dim * 6, hidden_dim)
    p["b_c1"] = _bias(keys[4], img_dim * 6, hidden_dim)
    p["w_c2"] = _xavier_uniform(keys[5], (hidden_dim, hidden_dim),
                                hidden_dim, hidden_dim)
    p["b_c2"] = _bias(keys[6], hidden_dim, hidden_dim)
    # lin_mm: Linear(H, H)
    p["w_mm"] = _xavier_uniform(keys[7], (hidden_dim, hidden_dim),
                                hidden_dim, hidden_dim)
    p["b_mm"] = _bias(keys[8], hidden_dim, hidden_dim)
    # att_linear_1: Linear(H, A); att_linear_2: Linear(A, 1) (stored as (1, A))
    p["w_a1"] = _xavier_uniform(keys[9], (hidden_dim, att_dim),
                                hidden_dim, att_dim)
    p["b_a1"] = _bias(keys[10], hidden_dim, att_dim)
    p["w_a2"] = _xavier_uniform(keys[11], (1, att_dim), att_dim, 1)
    p["b_a2"] = _bias(keys[12], att_dim, 1)
    # linear_separate: Linear(D, H)
    p["w_sep"] = _xavier_uniform(keys[13], (img_dim, hidden_dim),
                                 img_dim, hidden_dim)
    p["b_sep"] = _bias(keys[14], img_dim, hidden_dim)
    return p


# --------------------------------- main ---------------------------------------

if __name__ == "__main__":
    # Small shapes consistent with the module
    B = 2            # batch
    L = 8            # sequence length
    V = 24           # vocab_size
    E = 32           # embedding_dim
    H = 32           # hidden_dim
    D = 16           # img_dim  (visual_context dim = 6*D = 96)
    A = 16           # att_dim
    NIMG = 6

    root = jax.random.PRNGKey(0)
    kp, k1, k2, k3, k4 = jax.random.split(root, 5)

    params = init_params(kp, V, E, H, D, A)

    speaker_embeds = jax.random.normal(k1, (B, E), jnp.float32)
    speaker_utterances = jax.random.randint(k2, (B, L), 1, V, jnp.int32)
    separate_images = jax.random.normal(k3, (B, NIMG, D), jnp.float32)
    visual_context = jax.random.normal(k4, (B, NIMG * D), jnp.float32)
    # pad mask: last 3 positions of each utterance are padding (nonzero == pad)
    masks = (jnp.arange(L)[None, :, None] >= (L - 3)).astype(jnp.int32)
    masks = jnp.broadcast_to(masks, (B, L, 1)).astype(jnp.int32)

    out = simulator_forward(params, speaker_embeds, speaker_utterances,
                            separate_images, visual_context, masks)
    out = jax.block_until_ready(out)

    assert out.shape == (B, NIMG, 1), out.shape
    assert bool(jnp.all(jnp.isfinite(out)))
    print("KERNEL_OK")
</pallas_src>

<mosaic_0001>
module attributes {stable_mosaic.version = 11 : i64} {
  func.func @simulator_kernel(%arg0: i32, %arg1: memref<16xi32, #tpu.memory_space<smem>>, %arg2: memref<2x32xf32, #tpu.memory_space<vmem>>, %arg3: memref<2x6x16xf32, #tpu.memory_space<vmem>>, %arg4: memref<2x96xf32, #tpu.memory_space<vmem>>, %arg5: memref<2x8xi32, #tpu.memory_space<vmem>>, %arg6: memref<24x32xf32, #tpu.memory_space<vmem>>, %arg7: memref<32x32xf32, #tpu.memory_space<vmem>>, %arg8: memref<1x32xf32, #tpu.memory_space<vmem>>, %arg9: memref<96x32xf32, #tpu.memory_space<vmem>>, %arg10: memref<1x32xf32, #tpu.memory_space<vmem>>, %arg11: memref<32x32xf32, #tpu.memory_space<vmem>>, %arg12: memref<1x32xf32, #tpu.memory_space<vmem>>, %arg13: memref<32x32xf32, #tpu.memory_space<vmem>>, %arg14: memref<1x32xf32, #tpu.memory_space<vmem>>, %arg15: memref<32x16xf32, #tpu.memory_space<vmem>>, %arg16: memref<1x16xf32, #tpu.memory_space<vmem>>, %arg17: memref<1x16xf32, #tpu.memory_space<vmem>>, %arg18: memref<1x1xf32, #tpu.memory_space<vmem>>, %arg19: memref<16x32xf32, #tpu.memory_space<vmem>>, %arg20: memref<1x32xf32, #tpu.memory_space<vmem>>, %arg21: memref<2x6xf32, #tpu.memory_space<vmem>>, %arg22: memref<16x32xf32, #tpu.memory_space<vmem>>) attributes {dimension_semantics = [#tpu.dimension_semantics<parallel>], iteration_bounds = array<i64: 1>, scalar_prefetch = 1 : i64, scratch_operands = 1 : i64, tpu.core_type = #tpu.core_type<tc>, window_params = [{transform_indices = @transform_0, window_bounds = array<i64: 2, 32>}, {transform_indices = @transform_1, window_bounds = array<i64: 2, 6, 16>}, {transform_indices = @transform_2, window_bounds = array<i64: 2, 96>}, {transform_indices = @transform_3, window_bounds = array<i64: 2, 8>}, {pipeline_mode = #tpu.pipeline_mode<synchronous>, transform_indices = @transform_4, window_bounds = array<i64: 24, 32>}, {pipeline_mode = #tpu.pipeline_mode<synchronous>, transform_indices = @transform_5, window_bounds = array<i64: 32, 32>}, {pipeline_mode = #tpu.pipeline_mode<synchronous>, transform_indices = @transform_6, window_bounds = array<i64: 1, 32>}, {pipeline_mode = #tpu.pipeline_mode<synchronous>, transform_indices = @transform_7, window_bounds = array<i64: 96, 32>}, {pipeline_mode = #tpu.pipeline_mode<synchronous>, transform_indices = @transform_8, window_bounds = array<i64: 1, 32>}, {pipeline_mode = #tpu.pipeline_mode<synchronous>, transform_indices = @transform_9, window_bounds = array<i64: 32, 32>}, {pipeline_mode = #tpu.pipeline_mode<synchronous>, transform_indices = @transform_10, window_bounds = array<i64: 1, 32>}, {pipeline_mode = #tpu.pipeline_mode<synchronous>, transform_indices = @transform_11, window_bounds = array<i64: 32, 32>}, {pipeline_mode = #tpu.pipeline_mode<synchronous>, transform_indices = @transform_12, window_bounds = array<i64: 1, 32>}, {pipeline_mode = #tpu.pipeline_mode<synchronous>, transform_indices = @transform_13, window_bounds = array<i64: 32, 16>}, {pipeline_mode = #tpu.pipeline_mode<synchronous>, transform_indices = @transform_14, window_bounds = array<i64: 1, 16>}, {pipeline_mode = #tpu.pipeline_mode<synchronous>, transform_indices = @transform_15, window_bounds = array<i64: 1, 16>}, {pipeline_mode = #tpu.pipeline_mode<synchronous>, transform_indices = @transform_16, window_bounds = array<i64: 1, 1>}, {pipeline_mode = #tpu.pipeline_mode<synchronous>, transform_indices = @transform_17, window_bounds = array<i64: 16, 32>}, {pipeline_mode = #tpu.pipeline_mode<synchronous>, transform_indices = @transform_18, window_bounds = array<i64: 1, 32>}, {transform_indices = @transform_19, window_bounds = array<i64: 2, 6>}]} {
    %c16_i32 = arith.constant 16 : i32
    %0 = arith.muli %arg0, %c16_i32 : i32
    %c0_i32 = arith.constant 0 : i32
    %1 = arith.addi %0, %c0_i32 : i32
    %2 = arith.index_cast %1 : i32 to index
    %3 = memref.load %arg1[%2] : memref<16xi32, #tpu.memory_space<smem>>
    %4 = arith.index_cast %3 : i32 to index
    %c0 = arith.constant 0 : index
    %5 = vector.load %arg6[%4, %c0] : memref<24x32xf32, #tpu.memory_space<vmem>>, vector<1x32xf32>
    %6 = arith.index_cast %c0_i32 : i32 to index
    %c0_0 = arith.constant 0 : index
    %7 = vector.load %arg22[%6, %c0_0] : memref<16x32xf32, #tpu.memory_space<vmem>>, vector<1x32xf32>
    tpu.vector_store %arg22[%6, %c0_0], %5 {strides = array<i32>} : memref<16x32xf32, #tpu.memory_space<vmem>>, vector<1x32xf32>,
    %c1_i32 = arith.constant 1 : i32
    %8 = arith.addi %0, %c1_i32 : i32
    %9 = arith.index_cast %8 : i32 to index
    %10 = memref.load %arg1[%9] : memref<16xi32, #tpu.memory_space<smem>>
    %11 = arith.index_cast %10 : i32 to index
    %c0_1 = arith.constant 0 : index
    %12 = vector.load %arg6[%11, %c0_1] : memref<24x32xf32, #tpu.memory_space<vmem>>, vector<1x32xf32>
    %13 = arith.index_cast %c1_i32 : i32 to index
    %c0_2 = arith.constant 0 : index
    %14 = vector.load %arg22[%13, %c0_2] : memref<16x32xf32, #tpu.memory_space<vmem>>, vector<1x32xf32>
    tpu.vector_store %arg22[%13, %c0_2], %12 {strides = array<i32>} : memref<16x32xf32, #tpu.memory_space<vmem>>, vector<1x32xf32>,
    %c2_i32 = arith.constant 2 : i32
    %15 = arith.addi %0, %c2_i32 : i32
    %16 = arith.index_cast %15 : i32 to index
    %17 = memref.load %arg1[%16] : memref<16xi32, #tpu.memory_space<smem>>
    %18 = arith.index_cast %17 : i32 to index
    %c0_3 = arith.constant 0 : index
    %19 = vector.load %arg6[%18, %c0_3] : memref<24x32xf32, #tpu.memory_space<vmem>>, vector<1x32xf32>
    %20 = arith.index_cast %c2_i32 : i32 to index
    %c0_4 = arith.constant 0 : index
    %21 = vector.load %arg22[%20, %c0_4] : memref<16x32xf32, #tpu.memory_space<vmem>>, vector<1x32xf32>
    tpu.vector_store %arg22[%20, %c0_4], %19 {strides = array<i32>} : memref<16x32xf32, #tpu.memory_space<vmem>>, vector<1x32xf32>,
    %c3_i32 = arith.constant 3 : i32
    %22 = arith.addi %0, %c3_i32 : i32
    %23 = arith.index_cast %22 : i32 to index
    %24 = memref.load %arg1[%23] : memref<16xi32, #tpu.memory_space<smem>>
    %25 = arith.index_cast %24 : i32 to index
    %c0_5 = arith.constant 0 : index
    %26 = vector.load %arg6[%25, %c0_5] : memref<24x32xf32, #tpu.memory_space<vmem>>, vector<1x32xf32>
    %27 = arith.index_cast %c3_i32 : i32 to index
    %c0_6 = arith.constant 0 : index
    %28 = vector.load %arg22[%27, %c0_6] : memref<16x32xf32, #tpu.memory_space<vmem>>, vector<1x32xf32>
    tpu.vector_store %arg22[%27, %c0_6], %26 {strides = array<i32>} : memref<16x32xf32, #tpu.memory_space<vmem>>, vector<1x32xf32>,
    %c4_i32 = arith.constant 4 : i32
    %29 = arith.addi %0, %c4_i32 : i32
    %30 = arith.index_cast %29 : i32 to index
    %31 = memref.load %arg1[%30] : memref<16xi32, #tpu.memory_space<smem>>
    %32 = arith.index_cast %31 : i32 to index
    %c0_7 = arith.constant 0 : index
    %33 = vector.load %arg6[%32, %c0_7] : memref<24x32xf32, #tpu.memory_space<vmem>>, vector<1x32xf32>
    %34 = arith.index_cast %c4_i32 : i32 to index
    %c0_8 = arith.constant 0 : index
    %35 = vector.load %arg22[%34, %c0_8] : memref<16x32xf32, #tpu.memory_space<vmem>>, vector<1x32xf32>
    tpu.vector_store %arg22[%34, %c0_8], %33 {strides = array<i32>} : memref<16x32xf32, #tpu.memory_space<vmem>>, vector<1x32xf32>,
    %c5_i32 = arith.constant 5 : i32
    %36 = arith.addi %0, %c5_i32 : i32
    %37 = arith.index_cast %36 : i32 to index
    %38 = memref.load %arg1[%37] : memref<16xi32, #tpu.memory_space<smem>>
    %39 = arith.index_cast %38 : i32 to index
    %c0_9 = arith.constant 0 : index
    %40 = vector.load %arg6[%39, %c0_9] : memref<24x32xf32, #tpu.memory_space<vmem>>, vector<1x32xf32>
    %41 = arith.index_cast %c5_i32 : i32 to index
    %c0_10 = arith.constant 0 : index
    %42 = vector.load %arg22[%41, %c0_10] : memref<16x32xf32, #tpu.memory_space<vmem>>, vector<1x32xf32>
    tpu.vector_store %arg22[%41, %c0_10], %40 {strides = array<i32>} : memref<16x32xf32, #tpu.memory_space<vmem>>, vector<1x32xf32>,
    %c6_i32 = arith.constant 6 : i32
    %43 = arith.addi %0, %c6_i32 : i32
    %44 = arith.index_cast %43 : i32 to index
    %45 = memref.load %arg1[%44] : memref<16xi32, #tpu.memory_space<smem>>
    %46 = arith.index_cast %45 : i32 to index
    %c0_11 = arith.constant 0 : index
    %47 = vector.load %arg6[%46, %c0_11] : memref<24x32xf32, #tpu.memory_space<vmem>>, vector<1x32xf32>
    %48 = arith.index_cast %c6_i32 : i32 to index
    %c0_12 = arith.constant 0 : index
    %49 = vector.load %arg22[%48, %c0_12] : memref<16x32xf32, #tpu.memory_space<vmem>>, vector<1x32xf32>
    tpu.vector_store %arg22[%48, %c0_12], %47 {strides = array<i32>} : memref<16x32xf32, #tpu.memory_space<vmem>>, vector<1x32xf32>,
    %c7_i32 = arith.constant 7 : i32
    %50 = arith.addi %0, %c7_i32 : i32
    %51 = arith.index_cast %50 : i32 to index
    %52 = memref.load %arg1[%51] : memref<16xi32, #tpu.memory_space<smem>>
    %53 = arith.index_cast %52 : i32 to index
    %c0_13 = arith.constant 0 : index
    %54 = vector.load %arg6[%53, %c0_13] : memref<24x32xf32, #tpu.memory_space<vmem>>, vector<1x32xf32>
    %55 = arith.index_cast %c7_i32 : i32 to index
    %c0_14 = arith.constant 0 : index
    %56 = vector.load %arg22[%55, %c0_14] : memref<16x32xf32, #tpu.memory_space<vmem>>, vector<1x32xf32>
    tpu.vector_store %arg22[%55, %c0_14], %54 {strides = array<i32>} : memref<16x32xf32, #tpu.memory_space<vmem>>, vector<1x32xf32>,
    %c8_i32 = arith.constant 8 : i32
    %57 = arith.addi %0, %c8_i32 : i32
    %58 = arith.index_cast %57 : i32 to index
    %59 = memref.load %arg1[%58] : memref<16xi32, #tpu.memory_space<smem>>
    %60 = arith.index_cast %59 : i32 to index
    %c0_15 = arith.constant 0 : index
    %61 = vector.load %arg6[%60, %c0_15] : memref<24x32xf32, #tpu.memory_space<vmem>>, vector<1x32xf32>
    %62 = arith.index_cast %c8_i32 : i32 to index
    %c0_16 = arith.constant 0 : index
    %63 = vector.load %arg22[%62, %c0_16] : memref<16x32xf32, #tpu.memory_space<vmem>>, vector<1x32xf32>
    tpu.vector_store %arg22[%62, %c0_16], %61 {strides = array<i32>} : memref<16x32xf32, #tpu.memory_space<vmem>>, vector<1x32xf32>,
    %c9_i32 = arith.constant 9 : i32
    %64 = arith.addi %0, %c9_i32 : i32
    %65 = arith.index_cast %64 : i32 to index
    %66 = memref.load %arg1[%65] : memref<16xi32, #tpu.memory_space<smem>>
    %67 = arith.index_cast %66 : i32 to index
    %c0_17 = arith.constant 0 : index
    %68 = vector.load %arg6[%67, %c0_17] : memref<24x32xf32, #tpu.memory_space<vmem>>, vector<1x32xf32>
    %69 = arith.index_cast %c9_i32 : i32 to index
    %c0_18 = arith.constant 0 : index
    %70 = vector.load %arg22[%69, %c0_18] : memref<16x32xf32, #tpu.memory_space<vmem>>, vector<1x32xf32>
    tpu.vector_store %arg22[%69, %c0_18], %68 {strides = array<i32>} : memref<16x32xf32, #tpu.memory_space<vmem>>, vector<1x32xf32>,
    %c10_i32 = arith.constant 10 : i32
    %71 = arith.addi %0, %c10_i32 : i32
    %72 = arith.index_cast %71 : i32 to index
    %73 = memref.load %arg1[%72] : memref<16xi32, #tpu.memory_space<smem>>
    %74 = arith.index_cast %73 : i32 to index
    %c0_19 = arith.constant 0 : index
    %75 = vector.load %arg6[%74, %c0_19] : memref<24x32xf32, #tpu.memory_space<vmem>>, vector<1x32xf32>
    %76 = arith.index_cast %c10_i32 : i32 to index
    %c0_20 = arith.constant 0 : index
    %77 = vector.load %arg22[%76, %c0_20] : memref<16x32xf32, #tpu.memory_space<vmem>>, vector<1x32xf32>
    tpu.vector_store %arg22[%76, %c0_20], %75 {strides = array<i32>} : memref<16x32xf32, #tpu.memory_space<vmem>>, vector<1x32xf32>,
    %c11_i32 = arith.constant 11 : i32
    %78 = arith.addi %0, %c11_i32 : i32
    %79 = arith.index_cast %78 : i32 to index
    %80 = memref.load %arg1[%79] : memref<16xi32, #tpu.memory_space<smem>>
    %81 = arith.index_cast %80 : i32 to index
    %c0_21 = arith.constant 0 : index
    %82 = vector.load %arg6[%81, %c0_21] : memref<24x32xf32, #tpu.memory_space<vmem>>, vector<1x32xf32>
    %83 = arith.index_cast %c11_i32 : i32 to index
    %c0_22 = arith.constant 0 : index
    %84 = vector.load %arg22[%83, %c0_22] : memref<16x32xf32, #tpu.memory_space<vmem>>, vector<1x32xf32>
    tpu.vector_store %arg22[%83, %c0_22], %82 {strides = array<i32>} : memref<16x32xf32, #tpu.memory_space<vmem>>, vector<1x32xf32>,
    %c12_i32 = arith.constant 12 : i32
    %85 = arith.addi %0, %c12_i32 : i32
    %86 = arith.index_cast %85 : i32 to index
    %87 = memref.load %arg1[%86] : memref<16xi32, #tpu.memory_space<smem>>
    %88 = arith.index_cast %87 : i32 to index
    %c0_23 = arith.constant 0 : index
    %89 = vector.load %arg6[%88, %c0_23] : memref<24x32xf32, #tpu.memory_space<vmem>>, vector<1x32xf32>
    %90 = arith.index_cast %c12_i32 : i32 to index
    %c0_24 = arith.constant 0 : index
    %91 = vector.load %arg22[%90, %c0_24] : memref<16x32xf32, #tpu.memory_space<vmem>>, vector<1x32xf32>
    tpu.vector_store %arg22[%90, %c0_24], %89 {strides = array<i32>} : memref<16x32xf32, #tpu.memory_space<vmem>>, vector<1x32xf32>,
    %c13_i32 = arith.constant 13 : i32
    %92 = arith.addi %0, %c13_i32 : i32
    %93 = arith.index_cast %92 : i32 to index
    %94 = memref.load %arg1[%93] : memref<16xi32, #tpu.memory_space<smem>>
    %95 = arith.index_cast %94 : i32 to index
    %c0_25 = arith.constant 0 : index
    %96 = vector.load %arg6[%95, %c0_25] : memref<24x32xf32, #tpu.memory_space<vmem>>, vector<1x32xf32>
    %97 = arith.index_cast %c13_i32 : i32 to index
    %c0_26 = arith.constant 0 : index
    %98 = vector.load %arg22[%97, %c0_26] : memref<16x32xf32, #tpu.memory_space<vmem>>, vector<1x32xf32>
    tpu.vector_store %arg22[%97, %c0_26], %96 {strides = array<i32>} : memref<16x32xf32, #tpu.memory_space<vmem>>, vector<1x32xf32>,
    %c14_i32 = arith.constant 14 : i32
    %99 = arith.addi %0, %c14_i32 : i32
    %100 = arith.index_cast %99 : i32 to index
    %101 = memref.load %arg1[%100] : memref<16xi32, #tpu.memory_space<smem>>
    %102 = arith.index_cast %101 : i32 to index
    %c0_27 = arith.constant 0 : index
    %103 = vector.load %arg6[%102, %c0_27] : memref<24x32xf32, #tpu.memory_space<vmem>>, vector<1x32xf32>
    %104 = arith.index_cast %c14_i32 : i32 to index
    %c0_28 = arith.constant 0 : index
    %105 = vector.load %arg22[%104, %c0_28] : memref<16x32xf32, #tpu.memory_space<vmem>>, vector<1x32xf32>
    tpu.vector_store %arg22[%104, %c0_28], %103 {strides = array<i32>} : memref<16x32xf32, #tpu.memory_space<vmem>>, vector<1x32xf32>,
    %c15_i32 = arith.constant 15 : i32
    %106 = arith.addi %0, %c15_i32 : i32
    %107 = arith.index_cast %106 : i32 to index
    %108 = memref.load %arg1[%107] : memref<16xi32, #tpu.memory_space<smem>>
    %109 = arith.index_cast %108 : i32 to index
    %c0_29 = arith.constant 0 : index
    %110 = vector.load %arg6[%109, %c0_29] : memref<24x32xf32, #tpu.memory_space<vmem>>, vector<1x32xf32>
    %111 = arith.index_cast %c15_i32 : i32 to index
    %c0_30 = arith.constant 0 : index
    %112 = vector.load %arg22[%111, %c0_30] : memref<16x32xf32, #tpu.memory_space<vmem>>, vector<1x32xf32>
    tpu.vector_store %arg22[%111, %c0_30], %110 {strides = array<i32>} : memref<16x32xf32, #tpu.memory_space<vmem>>, vector<1x32xf32>,
    %c16_i32_31 = arith.constant 16 : i32
    %c0_32 = arith.constant 0 : index
    %c0_33 = arith.constant 0 : index
    %113 = vector.load %arg4[%c0_32, %c0_33] : memref<2x96xf32, #tpu.memory_space<vmem>>, vector<2x96xf32>
    %cst = arith.constant dense<0.000000e+00> : vector<2xf32>
    %114 = vector.multi_reduction <add>, %113, %cst [1] : vector<2x96xf32> to vector<2xf32>
    %115 = vector.shape_cast %114 : vector<2xf32> to vector<2x1xf32>
    %cst_34 = arith.constant 9.600000e+01 : f32
    %116 = vector.broadcast %cst_34 : f32 to vector<2x1xf32>
    %117 = arith.divf %115, %116 : vector<2x1xf32>
    %118 = arith.mulf %113, %113 : vector<2x96xf32>
    %cst_35 = arith.constant dense<0.000000e+00> : vector<2xf32>
    %119 = vector.multi_reduction <add>, %118, %cst_35 [1] : vector<2x96xf32> to vector<2xf32>
    %120 = vector.shape_cast %119 : vector<2xf32> to vector<2x1xf32>
    %cst_36 = arith.constant 9.600000e+01 : f32
    %121 = vector.broadcast %cst_36 : f32 to vector<2x1xf32>
    %122 = arith.divf %120, %121 : vector<2x1xf32>
    %123 = arith.mulf %117, %117 : vector<2x1xf32>
    %124 = arith.subf %122, %123 : vector<2x1xf32>
    %cst_37 = arith.constant 1.0105263 : f32
    %125 = vector.broadcast %cst_37 : f32 to vector<2x1xf32>
    %126 = arith.mulf %124, %125 : vector<2x1xf32>
    %cst_38 = arith.constant 0.000000e+00 : f32
    %127 = vector.broadcast %cst_38 : f32 to vector<2x1xf32>
    %128 = arith.maximumf %126, %127 : vector<2x1xf32>
    %129 = vector.broadcast %117 : vector<2x1xf32> to vector<2x96xf32>
    %130 = arith.subf %113, %129 : vector<2x96xf32>
    %131 = math.rsqrt %128 : vector<2x1xf32>
    %132 = vector.broadcast %131 : vector<2x1xf32> to vector<2x96xf32>
    %133 = arith.mulf %130, %132 : vector<2x96xf32>
    %c0_39 = arith.constant 0 : index
    %c0_40 = arith.constant 0 : index
    %134 = vector.load %arg2[%c0_39, %c0_40] : memref<2x32xf32, #tpu.memory_space<vmem>>, vector<2x32xf32>
    %cst_41 = arith.constant dense<0.000000e+00> : vector<2xf32>
    %135 = vector.multi_reduction <add>, %134, %cst_41 [1] : vector<2x32xf32> to vector<2xf32>
    %136 = vector.shape_cast %135 : vector<2xf32> to vector<2x1xf32>
    %cst_42 = arith.constant 3.200000e+01 : f32
    %137 = vector.broadcast %cst_42 : f32 to vector<2x1xf32>
    %138 = arith.divf %136, %137 : vector<2x1xf32>
    %139 = arith.mulf %134, %134 : vector<2x32xf32>
    %cst_43 = arith.constant dense<0.000000e+00> : vector<2xf32>
    %140 = vector.multi_reduction <add>, %139, %cst_43 [1] : vector<2x32xf32> to vector<2xf32>
    %141 = vector.shape_cast %140 : vector<2xf32> to vector<2x1xf32>
    %cst_44 = arith.constant 3.200000e+01 : f32
    %142 = vector.broadcast %cst_44 : f32 to vector<2x1xf32>
    %143 = arith.divf %141, %142 : vector<2x1xf32>
    %144 = arith.mulf %138, %138 : vector<2x1xf32>
    %145 = arith.subf %143, %144 : vector<2x1xf32>
    %cst_45 = arith.constant 1.03225803 : f32
    %146 = vector.broadcast %cst_45 : f32 to vector<2x1xf32>
    %147 = arith.mulf %145, %146 : vector<2x1xf32>
    %cst_46 = arith.constant 0.000000e+00 : f32
    %148 = vector.broadcast %cst_46 : f32 to vector<2x1xf32>
    %149 = arith.maximumf %147, %148 : vector<2x1xf32>
    %150 = vector.broadcast %138 : vector<2x1xf32> to vector<2x32xf32>
    %151 = arith.subf %134, %150 : vector<2x32xf32>
    %152 = math.rsqrt %149 : vector<2x1xf32>
    %153 = vector.broadcast %152 : vector<2x1xf32> to vector<2x32xf32>
    %154 = arith.mulf %151, %153 : vector<2x32xf32>
    %c0_47 = arith.constant 0 : index
    %c0_48 = arith.constant 0 : index
    %c0_49 = arith.constant 0 : index
    %155 = vector.load %arg3[%c0_47, %c0_48, %c0_49] : memref<2x6x16xf32, #tpu.memory_space<vmem>>, vector<2x6x16xf32>
    %156 = vector.shape_cast %155 : vector<2x6x16xf32> to vector<12x16xf32>
    %cst_50 = arith.constant dense<0.000000e+00> : vector<12xf32>
    %157 = vector.multi_reduction <add>, %156, %cst_50 [1] : vector<12x16xf32> to vector<12xf32>
    %158 = vector.shape_cast %157 : vector<12xf32> to vector<12x1xf32>
    %cst_51 = arith.constant 1.600000e+01 : f32
    %159 = vector.broadcast %cst_51 : f32 to vector<12x1xf32>
    %160 = arith.divf %158, %159 : vector<12x1xf32>
    %161 = arith.mulf %156, %156 : vector<12x16xf32>
    %cst_52 = arith.constant dense<0.000000e+00> : vector<12xf32>
    %162 = vector.multi_reduction <add>, %161, %cst_52 [1] : vector<12x16xf32> to vector<12xf32>
    %163 = vector.shape_cast %162 : vector<12xf32> to vector<12x1xf32>
    %cst_53 = arith.constant 1.600000e+01 : f32
    %164 = vector.broadcast %cst_53 : f32 to vector<12x1xf32>
    %165 = arith.divf %163, %164 : vector<12x1xf32>
    %166 = arith.mulf %160, %160 : vector<12x1xf32>
    %167 = arith.subf %165, %166 : vector<12x1xf32>
    %cst_54 = arith.constant 1.06666672 : f32
    %168 = vector.broadcast %cst_54 : f32 to vector<12x1xf32>
    %169 = arith.mulf %167, %168 : vector<12x1xf32>
    %cst_55 = arith.constant 0.000000e+00 : f32
    %170 = vector.broadcast %cst_55 : f32 to vector<12x1xf32>
    %171 = arith.maximumf %169, %170 : vector<12x1xf32>
    %172 = vector.broadcast %160 : vector<12x1xf32> to vector<12x16xf32>
    %173 = arith.subf %156, %172 : vector<12x16xf32>
    %174 = math.rsqrt %171 : vector<12x1xf32>
    %175 = vector.broadcast %174 : vector<12x1xf32> to vector<12x16xf32>
    %176 = arith.mulf %173, %175 : vector<12x16xf32>
    %c0_56 = arith.constant 0 : index
    %c0_57 = arith.constant 0 : index
    %177 = vector.load %arg9[%c0_56, %c0_57] : memref<96x32xf32, #tpu.memory_space<vmem>>, vector<96x32xf32>
    %178 = arith.truncf %133 : vector<2x96xf32> to vector<2x96xbf16>
    %179 = arith.truncf %177 : vector<96x32xf32> to vector<96x32xbf16>
    %cst_58 = arith.constant dense<0.000000e+00> : vector<2x32xf32>
    %180 = tpu.matmul %178, %179, %cst_58 {dimension_numbers = #tpu.dot_dimension_numbers<[1], [0], [0], [1], [0, 0, 1, 1], [], []>} : vector<2x96xbf16>, vector<96x32xbf16>, vector<2x32xf32> -> vector<2x32xf32>
    %c0_59 = arith.constant 0 : index
    %c0_60 = arith.constant 0 : index
    %181 = vector.load %arg10[%c0_59, %c0_60] : memref<1x32xf32, #tpu.memory_space<vmem>>, vector<1x32xf32>
    %182 = vector.broadcast %181 : vector<1x32xf32> to vector<2x32xf32>
    %183 = arith.addf %180, %182 : vector<2x32xf32>
    %cst_61 = arith.constant 0.000000e+00 : f32
    %184 = vector.broadcast %cst_61 : f32 to vector<2x32xf32>
    %185 = arith.cmpf ogt, %183, %184 : vector<2x32xf32>
    %cst_62 = arith.constant 0.00999999977 : f32
    %186 = vector.broadcast %cst_62 : f32 to vector<2x32xf32>
    %187 = arith.mulf %186, %183 : vector<2x32xf32>
    %188 = arith.select %185, %183, %187 : vector<2x32xi1>, vector<2x32xf32>
    %c0_63 = arith.constant 0 : index
    %c0_64 = arith.constant 0 : index
    %189 = vector.load %arg11[%c0_63, %c0_64] : memref<32x32xf32, #tpu.memory_space<vmem>>, vector<32x32xf32>
    %190 = arith.truncf %188 : vector<2x32xf32> to vector<2x32xbf16>
    %191 = arith.truncf %189 : vector<32x32xf32> to vector<32x32xbf16>
    %cst_65 = arith.constant dense<0.000000e+00> : vector<2x32xf32>
    %192 = tpu.matmul %190, %191, %cst_65 {dimension_numbers = #tpu.dot_dimension_numbers<[1], [0], [0], [1], [0, 0, 1, 1], [], []>} : vector<2x32xbf16>, vector<32x32xbf16>, vector<2x32xf32> -> vector<2x32xf32>
    %c0_66 = arith.constant 0 : index
    %c0_67 = arith.constant 0 : index
    %193 = vector.load %arg12[%c0_66, %c0_67] : memref<1x32xf32, #tpu.memory_space<vmem>>, vector<1x32xf32>
    %194 = vector.broadcast %193 : vector<1x32xf32> to vector<2x32xf32>
    %195 = arith.addf %192, %194 : vector<2x32xf32>
    %cst_68 = arith.constant 0.000000e+00 : f32
    %196 = vector.broadcast %cst_68 : f32 to vector<2x32xf32>
    %197 = arith.cmpf ogt, %195, %196 : vector<2x32xf32>
    %cst_69 = arith.constant 0.00999999977 : f32
    %198 = vector.broadcast %cst_69 : f32 to vector<2x32xf32>
    %199 = arith.mulf %198, %195 : vector<2x32xf32>
    %200 = arith.select %197, %195, %199 : vector<2x32xi1>, vector<2x32xf32>
    %cst_70 = arith.constant dense<0.000000e+00> : vector<2xf32>
    %201 = vector.multi_reduction <add>, %200, %cst_70 [1] : vector<2x32xf32> to vector<2xf32>
    %202 = vector.shape_cast %201 : vector<2xf32> to vector<2x1xf32>
    %cst_71 = arith.constant 3.200000e+01 : f32
    %203 = vector.broadcast %cst_71 : f32 to vector<2x1xf32>
    %204 = arith.divf %202, %203 : vector<2x1xf32>
    %205 = arith.mulf %200, %200 : vector<2x32xf32>
    %cst_72 = arith.constant dense<0.000000e+00> : vector<2xf32>
    %206 = vector.multi_reduction <add>, %205, %cst_72 [1] : vector<2x32xf32> to vector<2xf32>
    %207 = vector.shape_cast %206 : vector<2xf32> to vector<2x1xf32>
    %cst_73 = arith.constant 3.200000e+01 : f32
    %208 = vector.broadcast %cst_73 : f32 to vector<2x1xf32>
    %209 = arith.divf %207, %208 : vector<2x1xf32>
    %210 = arith.mulf %204, %204 : vector<2x1xf32>
    %211 = arith.subf %209, %210 : vector<2x1xf32>
    %cst_74 = arith.constant 1.03225803 : f32
    %212 = vector.broadcast %cst_74 : f32 to vector<2x1xf32>
    %213 = arith.mulf %211, %212 : vector<2x1xf32>
    %cst_75 = arith.constant 0.000000e+00 : f32
    %214 = vector.broadcast %cst_75 : f32 to vector<2x1xf32>
    %215 = arith.maximumf %213, %214 : vector<2x1xf32>
    %216 = vector.broadcast %204 : vector<2x1xf32> to vector<2x32xf32>
    %217 = arith.subf %200, %216 : vector<2x32xf32>
    %218 = math.rsqrt %215 : vector<2x1xf32>
    %219 = vector.broadcast %218 : vector<2x1xf32> to vector<2x32xf32>
    %220 = arith.mulf %217, %219 : vector<2x32xf32>
    %c0_76 = arith.constant 0 : index
    %c0_77 = arith.constant 0 : index
    %221 = vector.load %arg22[%c0_76, %c0_77] : memref<16x32xf32, #tpu.memory_space<vmem>>, vector<16x32xf32>
    %c0_78 = arith.constant 0 : index
    %c0_79 = arith.constant 0 : index
    %222 = vector.load %arg7[%c0_78, %c0_79] : memref<32x32xf32, #tpu.memory_space<vmem>>, vector<32x32xf32>
    %223 = arith.truncf %221 : vector<16x32xf32> to vector<16x32xbf16>
    %224 = arith.truncf %222 : vector<32x32xf32> to vector<32x32xbf16>
    %cst_80 = arith.constant dense<0.000000e+00> : vector<16x32xf32>
    %225 = tpu.matmul %223, %224, %cst_80 {dimension_numbers = #tpu.dot_dimension_numbers<[1], [0], [0], [1], [0, 0, 1, 1], [], []>} : vector<16x32xbf16>, vector<32x32xbf16>, vector<16x32xf32> -> vector<16x32xf32>
    %c0_81 = arith.constant 0 : index
    %c0_82 = arith.constant 0 : index
    %226 = vector.load %arg8[%c0_81, %c0_82] : memref<1x32xf32, #tpu.memory_space<vmem>>, vector<1x32xf32>
    %227 = vector.broadcast %226 : vector<1x32xf32> to vector<16x32xf32>
    %228 = arith.addf %225, %227 : vector<16x32xf32>
    %cst_83 = arith.constant 0.000000e+00 : f32
    %229 = vector.broadcast %cst_83 : f32 to vector<16x32xf32>
    %230 = arith.cmpf ogt, %228, %229 : vector<16x32xf32>
    %cst_84 = arith.constant 0.00999999977 : f32
    %231 = vector.broadcast %cst_84 : f32 to vector<16x32xf32>
    %232 = arith.mulf %231, %228 : vector<16x32xf32>
    %233 = arith.select %230, %228, %232 : vector<16x32xi1>, vector<16x32xf32>
    %cst_85 = arith.constant dense<0.000000e+00> : vector<16xf32>
    %234 = vector.multi_reduction <add>, %233, %cst_85 [1] : vector<16x32xf32> to vector<16xf32>
    %235 = vector.shape_cast %234 : vector<16xf32> to vector<16x1xf32>
    %cst_86 = arith.constant 3.200000e+01 : f32
    %236 = vector.broadcast %cst_86 : f32 to vector<16x1xf32>
    %237 = arith.divf %235, %236 : vector<16x1xf32>
    %238 = arith.mulf %233, %233 : vector<16x32xf32>
    %cst_87 = arith.constant dense<0.000000e+00> : vector<16xf32>
    %239 = vector.multi_reduction <add>, %238, %cst_87 [1] : vector<16x32xf32> to vector<16xf32>
    %240 = vector.shape_cast %239 : vector<16xf32> to vector<16x1xf32>
    %cst_88 = arith.constant 3.200000e+01 : f32
    %241 = vector.broadcast %cst_88 : f32 to vector<16x1xf32>
    %242 = arith.divf %240, %241 : vector<16x1xf32>
    %243 = arith.mulf %237, %237 : vector<16x1xf32>
    %244 = arith.subf %242, %243 : vector<16x1xf32>
    %cst_89 = arith.constant 1.03225803 : f32
    %245 = vector.broadcast %cst_89 : f32 to vector<16x1xf32>
    %246 = arith.mulf %244, %245 : vector<16x1xf32>
    %cst_90 = arith.constant 0.000000e+00 : f32
    %247 = vector.broadcast %cst_90 : f32 to vector<16x1xf32>
    %248 = arith.maximumf %246, %247 : vector<16x1xf32>
    %249 = vector.broadcast %237 : vector<16x1xf32> to vector<16x32xf32>
    %250 = arith.subf %233, %249 : vector<16x32xf32>
    %251 = math.rsqrt %248 : vector<16x1xf32>
    %252 = vector.broadcast %251 : vector<16x1xf32> to vector<16x32xf32>
    %253 = arith.mulf %250, %252 : vector<16x32xf32>
    %254 = vector.shape_cast %220 : vector<2x32xf32> to vector<2x1x32xf32>
    %255 = vector.shape_cast %254 : vector<2x1x32xf32> to vector<2x1x32xf32>
    %256 = vector.broadcast %255 : vector<2x1x32xf32> to vector<2x8x32xf32>
    %257 = vector.shape_cast %256 : vector<2x8x32xf32> to vector<16x32xf32>
    %258 = arith.mulf %253, %257 : vector<16x32xf32>
    %c0_91 = arith.constant 0 : index
    %c0_92 = arith.constant 0 : index
    %259 = vector.load %arg13[%c0_91, %c0_92] : memref<32x32xf32, #tpu.memory_space<vmem>>, vector<32x32xf32>
    %260 = arith.truncf %258 : vector<16x32xf32> to vector<16x32xbf16>
    %261 = arith.truncf %259 : vector<32x32xf32> to vector<32x32xbf16>
    %cst_93 = arith.constant dense<0.000000e+00> : vector<16x32xf32>
    %262 = tpu.matmul %260, %261, %cst_93 {dimension_numbers = #tpu.dot_dimension_numbers<[1], [0], [0], [1], [0, 0, 1, 1], [], []>} : vector<16x32xbf16>, vector<32x32xbf16>, vector<16x32xf32> -> vector<16x32xf32>
    %c0_94 = arith.constant 0 : index
    %c0_95 = arith.constant 0 : index
    %263 = vector.load %arg14[%c0_94, %c0_95] : memref<1x32xf32, #tpu.memory_space<vmem>>, vector<1x32xf32>
    %264 = vector.broadcast %263 : vector<1x32xf32> to vector<16x32xf32>
    %265 = arith.addf %262, %264 : vector<16x32xf32>
    %cst_96 = arith.constant 0.000000e+00 : f32
    %266 = vector.broadcast %cst_96 : f32 to vector<16x32xf32>
    %267 = arith.maximumf %265, %266 : vector<16x32xf32>
    %c0_97 = arith.constant 0 : index
    %c0_98 = arith.constant 0 : index
    %268 = vector.load %arg15[%c0_97, %c0_98] : memref<32x16xf32, #tpu.memory_space<vmem>>, vector<32x16xf32>
    %269 = arith.truncf %267 : vector<16x32xf32> to vector<16x32xbf16>
    %270 = arith.truncf %268 : vector<32x16xf32> to vector<32x16xbf16>
    %cst_99 = arith.constant dense<0.000000e+00> : vector<16x16xf32>
    %271 = tpu.matmul %269, %270, %cst_99 {dimension_numbers = #tpu.dot_dimension_numbers<[1], [0], [0], [1], [0, 0, 1, 1], [], []>} : vector<16x32xbf16>, vector<32x16xbf16>, vector<16x16xf32> -> vector<16x16xf32>
    %c0_100 = arith.constant 0 : index
    %c0_101 = arith.constant 0 : index
    %272 = vector.load %arg16[%c0_100, %c0_101] : memref<1x16xf32, #tpu.memory_space<vmem>>, vector<1x16xf32>
    %273 = vector.broadcast %272 : vector<1x16xf32> to vector<16x16xf32>
    %274 = arith.addf %271, %273 : vector<16x16xf32>
    %cst_102 = arith.constant 0.000000e+00 : f32
    %275 = vector.broadcast %cst_102 : f32 to vector<16x16xf32>
    %276 = arith.cmpf ogt, %274, %275 : vector<16x16xf32>
    %cst_103 = arith.constant 0.00999999977 : f32
    %277 = vector.broadcast %cst_103 : f32 to vector<16x16xf32>
    %278 = arith.mulf %277, %274 : vector<16x16xf32>
    %279 = arith.select %276, %274, %278 : vector<16x16xi1>, vector<16x16xf32>
    %cst_104 = arith.constant dense<0.000000e+00> : vector<16xf32>
    %280 = vector.multi_reduction <add>, %279, %cst_104 [1] : vector<16x16xf32> to vector<16xf32>
    %281 = vector.shape_cast %280 : vector<16xf32> to vector<16x1xf32>
    %cst_105 = arith.constant 1.600000e+01 : f32
    %282 = vector.broadcast %cst_105 : f32 to vector<16x1xf32>
    %283 = arith.divf %281, %282 : vector<16x1xf32>
    %284 = arith.mulf %279, %279 : vector<16x16xf32>
    %cst_106 = arith.constant dense<0.000000e+00> : vector<16xf32>
    %285 = vector.multi_reduction <add>, %284, %cst_106 [1] : vector<16x16xf32> to vector<16xf32>
    %286 = vector.shape_cast %285 : vector<16xf32> to vector<16x1xf32>
    %cst_107 = arith.constant 1.600000e+01 : f32
    %287 = vector.broadcast %cst_107 : f32 to vector<16x1xf32>
    %288 = arith.divf %286, %287 : vector<16x1xf32>
    %289 = arith.mulf %283, %283 : vector<16x1xf32>
    %290 = arith.subf %288, %289 : vector<16x1xf32>
    %cst_108 = arith.constant 1.06666672 : f32
    %291 = vector.broadcast %cst_108 : f32 to vector<16x1xf32>
    %292 = arith.mulf %290, %291 : vector<16x1xf32>
    %cst_109 = arith.constant 0.000000e+00 : f32
    %293 = vector.broadcast %cst_109 : f32 to vector<16x1xf32>
    %294 = arith.maximumf %292, %293 : vector<16x1xf32>
    %295 = vector.broadcast %283 : vector<16x1xf32> to vector<16x16xf32>
    %296 = arith.subf %279, %295 : vector<16x16xf32>
    %297 = math.rsqrt %294 : vector<16x1xf32>
    %298 = vector.broadcast %297 : vector<16x1xf32> to vector<16x16xf32>
    %299 = arith.mulf %296, %298 : vector<16x16xf32>
    %c0_110 = arith.constant 0 : index
    %c0_111 = arith.constant 0 : index
    %300 = vector.load %arg17[%c0_110, %c0_111] : memref<1x16xf32, #tpu.memory_space<vmem>>, vector<1x16xf32>
    %301 = vector.shape_cast %300 : vector<1x16xf32> to vector<1x1x16xf32>
    %302 = vector.shape_cast %299 : vector<16x16xf32> to vector<2x8x16xf32>
    %303 = vector.broadcast %301 : vector<1x1x16xf32> to vector<2x8x16xf32>
    %304 = arith.mulf %302, %303 : vector<2x8x16xf32>
    %cst_112 = arith.constant dense<0.000000e+00> : vector<2x8xf32>
    %305 = vector.multi_reduction <add>, %304, %cst_112 [2] : vector<2x8x16xf32> to vector<2x8xf32>
    %c0_113 = arith.constant 0 : index
    %c0_114 = arith.constant 0 : index
    %306 = vector.load %arg18[%c0_113, %c0_114] : memref<1x1xf32, #tpu.memory_space<vmem>>, vector<1x1xf32>
    %307 = vector.broadcast %306 : vector<1x1xf32> to vector<2x8xf32>
    %308 = arith.addf %305, %307 : vector<2x8xf32>
    %c0_115 = arith.constant 0 : index
    %c0_116 = arith.constant 0 : index
    %309 = vector.load %arg5[%c0_115, %c0_116] : memref<2x8xi32, #tpu.memory_space<vmem>>, vector<2x8xi32>
    %c0_i32_117 = arith.constant 0 : i32
    %310 = vector.broadcast %c0_i32_117 : i32 to vector<2x8xi32>
    %311 = arith.cmpi ne, %309, %310 : vector<2x8xi32>
    %cst_118 = arith.constant -1.000000e+30 : f32
    %312 = vector.broadcast %cst_118 : f32 to vector<2x8xf32>
    %313 = arith.select %311, %312, %308 : vector<2x8xi1>, vector<2x8xf32>
    %cst_119 = arith.constant dense<0xFF800000> : vector<2xf32>
    %314 = vector.multi_reduction <maximumf>, %313, %cst_119 [1] : vector<2x8xf32> to vector<2xf32>
    %315 = vector.shape_cast %314 : vector<2xf32> to vector<2x1xf32>
    %316 = vector.broadcast %315 : vector<2x1xf32> to vector<2x8xf32>
    %317 = arith.subf %313, %316 : vector<2x8xf32>
    %318 = math.exp %317 : vector<2x8xf32>
    %cst_120 = arith.constant dense<0.000000e+00> : vector<2xf32>
    %319 = vector.multi_reduction <add>, %318, %cst_120 [1] : vector<2x8xf32> to vector<2xf32>
    %320 = vector.shape_cast %319 : vector<2xf32> to vector<2x1xf32>
    %321 = vector.broadcast %320 : vector<2x1xf32> to vector<2x8xf32>
    %322 = arith.divf %318, %321 : vector<2x8xf32>
    %323 = vector.shape_cast %267 : vector<16x32xf32> to vector<2x8x32xf32>
    %324 = vector.shape_cast %322 : vector<2x8xf32> to vector<2x8x1xf32>
    %325 = vector.broadcast %324 : vector<2x8x1xf32> to vector<2x8x32xf32>
    %326 = arith.mulf %323, %325 : vector<2x8x32xf32>
    %cst_121 = arith.constant dense<0.000000e+00> : vector<2x32xf32>
    %327 = vector.multi_reduction <add>, %326, %cst_121 [1] : vector<2x8x32xf32> to vector<2x32xf32>
    %c0_122 = arith.constant 0 : index
    %c0_123 = arith.constant 0 : index
    %328 = vector.load %arg7[%c0_122, %c0_123] : memref<32x32xf32, #tpu.memory_space<vmem>>, vector<32x32xf32>
    %329 = arith.truncf %154 : vector<2x32xf32> to vector<2x32xbf16>
    %330 = arith.truncf %328 : vector<32x32xf32> to vector<32x32xbf16>
    %cst_124 = arith.constant dense<0.000000e+00> : vector<2x32xf32>
    %331 = tpu.matmul %329, %330, %cst_124 {dimension_numbers = #tpu.dot_dimension_numbers<[1], [0], [0], [1], [0, 0, 1, 1], [], []>} : vector<2x32xbf16>, vector<32x32xbf16>, vector<2x32xf32> -> vector<2x32xf32>
    %c0_125 = arith.constant 0 : index
    %c0_126 = arith.constant 0 : index
    %332 = vector.load %arg8[%c0_125, %c0_126] : memref<1x32xf32, #tpu.memory_space<vmem>>, vector<1x32xf32>
    %333 = vector.broadcast %332 : vector<1x32xf32> to vector<2x32xf32>
    %334 = arith.addf %331, %333 : vector<2x32xf32>
    %cst_127 = arith.constant 0.000000e+00 : f32
    %335 = vector.broadcast %cst_127 : f32 to vector<2x32xf32>
    %336 = arith.cmpf ogt, %334, %335 : vector<2x32xf32>
    %cst_128 = arith.constant 0.00999999977 : f32
    %337 = vector.broadcast %cst_128 : f32 to vector<2x32xf32>
    %338 = arith.mulf %337, %334 : vector<2x32xf32>
    %339 = arith.select %336, %334, %338 : vector<2x32xi1>, vector<2x32xf32>
    %cst_129 = arith.constant dense<0.000000e+00> : vector<2xf32>
    %340 = vector.multi_reduction <add>, %339, %cst_129 [1] : vector<2x32xf32> to vector<2xf32>
    %341 = vector.shape_cast %340 : vector<2xf32> to vector<2x1xf32>
    %cst_130 = arith.constant 3.200000e+01 : f32
    %342 = vector.broadcast %cst_130 : f32 to vector<2x1xf32>
    %343 = arith.divf %341, %342 : vector<2x1xf32>
    %344 = arith.mulf %339, %339 : vector<2x32xf32>
    %cst_131 = arith.constant dense<0.000000e+00> : vector<2xf32>
    %345 = vector.multi_reduction <add>, %344, %cst_131 [1] : vector<2x32xf32> to vector<2xf32>
    %346 = vector.shape_cast %345 : vector<2xf32> to vector<2x1xf32>
    %cst_132 = arith.constant 3.200000e+01 : f32
    %347 = vector.broadcast %cst_132 : f32 to vector<2x1xf32>
    %348 = arith.divf %346, %347 : vector<2x1xf32>
    %349 = arith.mulf %343, %343 : vector<2x1xf32>
    %350 = arith.subf %348, %349 : vector<2x1xf32>
    %cst_133 = arith.constant 1.03225803 : f32
    %351 = vector.broadcast %cst_133 : f32 to vector<2x1xf32>
    %352 = arith.mulf %350, %351 : vector<2x1xf32>
    %cst_134 = arith.constant 0.000000e+00 : f32
    %353 = vector.broadcast %cst_134 : f32 to vector<2x1xf32>
    %354 = arith.maximumf %352, %353 : vector<2x1xf32>
    %355 = vector.broadcast %343 : vector<2x1xf32> to vector<2x32xf32>
    %356 = arith.subf %339, %355 : vector<2x32xf32>
    %357 = math.rsqrt %354 : vector<2x1xf32>
    %358 = vector.broadcast %357 : vector<2x1xf32> to vector<2x32xf32>
    %359 = arith.mulf %356, %358 : vector<2x32xf32>
    %360 = arith.mulf %359, %220 : vector<2x32xf32>
    %c0_135 = arith.constant 0 : index
    %c0_136 = arith.constant 0 : index
    %361 = vector.load %arg13[%c0_135, %c0_136] : memref<32x32xf32, #tpu.memory_space<vmem>>, vector<32x32xf32>
    %362 = arith.truncf %360 : vector<2x32xf32> to vector<2x32xbf16>
    %363 = arith.truncf %361 : vector<32x32xf32> to vector<32x32xbf16>
    %cst_137 = arith.constant dense<0.000000e+00> : vector<2x32xf32>
    %364 = tpu.matmul %362, %363, %cst_137 {dimension_numbers = #tpu.dot_dimension_numbers<[1], [0], [0], [1], [0, 0, 1, 1], [], []>} : vector<2x32xbf16>, vector<32x32xbf16>, vector<2x32xf32> -> vector<2x32xf32>
    %c0_138 = arith.constant 0 : index
    %c0_139 = arith.constant 0 : index
    %365 = vector.load %arg14[%c0_138, %c0_139] : memref<1x32xf32, #tpu.memory_space<vmem>>, vector<1x32xf32>
    %366 = vector.broadcast %365 : vector<1x32xf32> to vector<2x32xf32>
    %367 = arith.addf %364, %366 : vector<2x32xf32>
    %cst_140 = arith.constant 0.000000e+00 : f32
    %368 = vector.broadcast %cst_140 : f32 to vector<2x32xf32>
    %369 = arith.maximumf %367, %368 : vector<2x32xf32>
    %cst_141 = arith.constant dense<0.000000e+00> : vector<2xf32>
    %370 = vector.multi_reduction <add>, %369, %cst_141 [1] : vector<2x32xf32> to vector<2xf32>
    %371 = vector.shape_cast %370 : vector<2xf32> to vector<2x1xf32>
    %cst_142 = arith.constant 3.200000e+01 : f32
    %372 = vector.broadcast %cst_142 : f32 to vector<2x1xf32>
    %373 = arith.divf %371, %372 : vector<2x1xf32>
    %374 = arith.mulf %369, %369 : vector<2x32xf32>
    %cst_143 = arith.constant dense<0.000000e+00> : vector<2xf32>
    %375 = vector.multi_reduction <add>, %374, %cst_143 [1] : vector<2x32xf32> to vector<2xf32>
    %376 = vector.shape_cast %375 : vector<2xf32> to vector<2x1xf32>
    %cst_144 = arith.constant 3.200000e+01 : f32
    %377 = vector.broadcast %cst_144 : f32 to vector<2x1xf32>
    %378 = arith.divf %376, %377 : vector<2x1xf32>
    %379 = arith.mulf %373, %373 : vector<2x1xf32>
    %380 = arith.subf %378, %379 : vector<2x1xf32>
    %cst_145 = arith.constant 1.03225803 : f32
    %381 = vector.broadcast %cst_145 : f32 to vector<2x1xf32>
    %382 = arith.mulf %380, %381 : vector<2x1xf32>
    %cst_146 = arith.constant 0.000000e+00 : f32
    %383 = vector.broadcast %cst_146 : f32 to vector<2x1xf32>
    %384 = arith.maximumf %382, %383 : vector<2x1xf32>
    %385 = vector.broadcast %373 : vector<2x1xf32> to vector<2x32xf32>
    %386 = arith.subf %369, %385 : vector<2x32xf32>
    %387 = math.rsqrt %384 : vector<2x1xf32>
    %388 = vector.broadcast %387 : vector<2x1xf32> to vector<2x32xf32>
    %389 = arith.mulf %386, %388 : vector<2x32xf32>
    %c0_147 = arith.constant 0 : index
    %c0_148 = arith.constant 0 : index
    %390 = vector.load %arg19[%c0_147, %c0_148] : memref<16x32xf32, #tpu.memory_space<vmem>>, vector<16x32xf32>
    %391 = arith.truncf %176 : vector<12x16xf32> to vector<12x16xbf16>
    %392 = arith.truncf %390 : vector<16x32xf32> to vector<16x32xbf16>
    %cst_149 = arith.constant dense<0.000000e+00> : vector<12x32xf32>
    %393 = tpu.matmul %391, %392, %cst_149 {dimension_numbers = #tpu.dot_dimension_numbers<[1], [0], [0], [1], [0, 0, 1, 1], [], []>} : vector<12x16xbf16>, vector<16x32xbf16>, vector<12x32xf32> -> vector<12x32xf32>
    %c0_150 = arith.constant 0 : index
    %c0_151 = arith.constant 0 : index
    %394 = vector.load %arg20[%c0_150, %c0_151] : memref<1x32xf32, #tpu.memory_space<vmem>>, vector<1x32xf32>
    %395 = vector.broadcast %394 : vector<1x32xf32> to vector<12x32xf32>
    %396 = arith.addf %393, %395 : vector<12x32xf32>
    %cst_152 = arith.constant 0.000000e+00 : f32
    %397 = vector.broadcast %cst_152 : f32 to vector<12x32xf32>
    %398 = arith.maximumf %396, %397 : vector<12x32xf32>
    %cst_153 = arith.constant dense<0.000000e+00> : vector<12xf32>
    %399 = vector.multi_reduction <add>, %398, %cst_153 [1] : vector<12x32xf32> to vector<12xf32>
    %400 = vector.shape_cast %399 : vector<12xf32> to vector<12x1xf32>
    %cst_154 = arith.constant 3.200000e+01 : f32
    %401 = vector.broadcast %cst_154 : f32 to vector<12x1xf32>
    %402 = arith.divf %400, %401 : vector<12x1xf32>
    %403 = arith.mulf %398, %398 : vector<12x32xf32>
    %cst_155 = arith.constant dense<0.000000e+00> : vector<12xf32>
    %404 = vector.multi_reduction <add>, %403, %cst_155 [1] : vector<12x32xf32> to vector<12xf32>
    %405 = vector.shape_cast %404 : vector<12xf32> to vector<12x1xf32>
    %cst_156 = arith.constant 3.200000e+01 : f32
    %406 = vector.broadcast %cst_156 : f32 to vector<12x1xf32>
    %407 = arith.divf %405, %406 : vector<12x1xf32>
    %408 = arith.mulf %402, %402 : vector<12x1xf32>
    %409 = arith.subf %407, %408 : vector<12x1xf32>
    %cst_157 = arith.constant 1.03225803 : f32
    %410 = vector.broadcast %cst_157 : f32 to vector<12x1xf32>
    %411 = arith.mulf %409, %410 : vector<12x1xf32>
    %cst_158 = arith.constant 0.000000e+00 : f32
    %412 = vector.broadcast %cst_158 : f32 to vector<12x1xf32>
    %413 = arith.maximumf %411, %412 : vector<12x1xf32>
    %414 = vector.broadcast %402 : vector<12x1xf32> to vector<12x32xf32>
    %415 = arith.subf %398, %414 : vector<12x32xf32>
    %416 = math.rsqrt %413 : vector<12x1xf32>
    %417 = vector.broadcast %416 : vector<12x1xf32> to vector<12x32xf32>
    %418 = arith.mulf %415, %417 : vector<12x32xf32>
    %419 = arith.mulf %327, %389 : vector<2x32xf32>
    %420 = vector.shape_cast %418 : vector<12x32xf32> to vector<2x6x32xf32>
    %421 = vector.shape_cast %419 : vector<2x32xf32> to vector<2x1x32xf32>
    %422 = vector.broadcast %421 : vector<2x1x32xf32> to vector<2x6x32xf32>
    %423 = arith.mulf %420, %422 : vector<2x6x32xf32>
    %cst_159 = arith.constant dense<0.000000e+00> : vector<2x6xf32>
    %424 = vector.multi_reduction <add>, %423, %cst_159 [2] : vector<2x6x32xf32> to vector<2x6xf32>
    %c0_160 = arith.constant 0 : index
    %c0_161 = arith.constant 0 : index
    %425 = vector.load %arg21[%c0_160, %c0_161] : memref<2x6xf32, #tpu.memory_space<vmem>>, vector<2x6xf32>
    tpu.vector_store %arg21[%c0_160, %c0_161], %424 {strides = array<i32>} : memref<2x6xf32, #tpu.memory_space<vmem>>, vector<2x6xf32>,
    return
  }
  func.func @transform_0(%arg0: i32, %arg1: memref<16xi32, #tpu.memory_space<smem>>) -> (i32, i32) {
    %c0_i32 = arith.constant 0 : i32
    %c0_i32_0 = arith.constant 0 : i32
    return %arg0, %c0_i32 : i32, i32
  }
  func.func @transform_1(%arg0: i32, %arg1: memref<16xi32, #tpu.memory_space<smem>>) -> (i32, i32, i32) {
    %c0_i32 = arith.constant 0 : i32
    %c0_i32_0 = arith.constant 0 : i32
    %c0_i32_1 = arith.constant 0 : i32
    return %arg0, %c0_i32, %c0_i32_0 : i32, i32, i32
  }
  func.func @transform_2(%arg0: i32, %arg1: memref<16xi32, #tpu.memory_space<smem>>) -> (i32, i32) {
    %c0_i32 = arith.constant 0 : i32
    %c0_i32_0 = arith.constant 0 : i32
    return %arg0, %c0_i32 : i32, i32
  }
  func.func @transform_3(%arg0: i32, %arg1: memref<16xi32, #tpu.memory_space<smem>>) -> (i32, i32) {
    %c0_i32 = arith.constant 0 : i32
    %c0_i32_0 = arith.constant 0 : i32
    return %arg0, %c0_i32 : i32, i32
  }
  func.func @transform_4(%arg0: i32, %arg1: memref<16xi32, #tpu.memory_space<smem>>) -> (i32, i32) {
    %c0_i32 = arith.constant 0 : i32
    %c0_i32_0 = arith.constant 0 : i32
    %c0_i32_1 = arith.constant 0 : i32
    return %c0_i32, %c0_i32_0 : i32, i32
  }
  func.func @transform_5(%arg0: i32, %arg1: memref<16xi32, #tpu.memory_space<smem>>) -> (i32, i32) {
    %c0_i32 = arith.constant 0 : i32
    %c0_i32_0 = arith.constant 0 : i32
    %c0_i32_1 = arith.constant 0 : i32
    return %c0_i32, %c0_i32_0 : i32, i32
  }
  func.func @transform_6(%arg0: i32, %arg1: memref<16xi32, #tpu.memory_space<smem>>) -> (i32, i32) {
    %c0_i32 = arith.constant 0 : i32
    %c0_i32_0 = arith.constant 0 : i32
    %c0_i32_1 = arith.constant 0 : i32
    return %c0_i32, %c0_i32_0 : i32, i32
  }
  func.func @transform_7(%arg0: i32, %arg1: memref<16xi32, #tpu.memory_space<smem>>) -> (i32, i32) {
    %c0_i32 = arith.constant 0 : i32
    %c0_i32_0 = arith.constant 0 : i32
    %c0_i32_1 = arith.constant 0 : i32
    return %c0_i32, %c0_i32_0 : i32, i32
  }
  func.func @transform_8(%arg0: i32, %arg1: memref<16xi32, #tpu.memory_space<smem>>) -> (i32, i32) {
    %c0_i32 = arith.constant 0 : i32
    %c0_i32_0 = arith.constant 0 : i32
    %c0_i32_1 = arith.constant 0 : i32
    return %c0_i32, %c0_i32_0 : i32, i32
  }
  func.func @transform_9(%arg0: i32, %arg1: memref<16xi32, #tpu.memory_space<smem>>) -> (i32, i32) {
    %c0_i32 = arith.constant 0 : i32
    %c0_i32_0 = arith.constant 0 : i32
    %c0_i32_1 = arith.constant 0 : i32
    return %c0_i32, %c0_i32_0 : i32, i32
  }
  func.func @transform_10(%arg0: i32, %arg1: memref<16xi32, #tpu.memory_space<smem>>) -> (i32, i32) {
    %c0_i32 = arith.constant 0 : i32
    %c0_i32_0 = arith.constant 0 : i32
    %c0_i32_1 = arith.constant 0 : i32
    return %c0_i32, %c0_i32_0 : i32, i32
  }
  func.func @transform_11(%arg0: i32, %arg1: memref<16xi32, #tpu.memory_space<smem>>) -> (i32, i32) {
    %c0_i32 = arith.constant 0 : i32
    %c0_i32_0 = arith.constant 0 : i32
    %c0_i32_1 = arith.constant 0 : i32
    return %c0_i32, %c0_i32_0 : i32, i32
  }
  func.func @transform_12(%arg0: i32, %arg1: memref<16xi32, #tpu.memory_space<smem>>) -> (i32, i32) {
    %c0_i32 = arith.constant 0 : i32
    %c0_i32_0 = arith.constant 0 : i32
    %c0_i32_1 = arith.constant 0 : i32
    return %c0_i32, %c0_i32_0 : i32, i32
  }
  func.func @transform_13(%arg0: i32, %arg1: memref<16xi32, #tpu.memory_space<smem>>) -> (i32, i32) {
    %c0_i32 = arith.constant 0 : i32
    %c0_i32_0 = arith.constant 0 : i32
    %c0_i32_1 = arith.constant 0 : i32
    return %c0_i32, %c0_i32_0 : i32, i32
  }
  func.func @transform_14(%arg0: i32, %arg1: memref<16xi32, #tpu.memory_space<smem>>) -> (i32, i32) {
    %c0_i32 = arith.constant 0 : i32
    %c0_i32_0 = arith.constant 0 : i32
    %c0_i32_1 = arith.constant 0 : i32
    return %c0_i32, %c0_i32_0 : i32, i32
  }
  func.func @transform_15(%arg0: i32, %arg1: memref<16xi32, #tpu.memory_space<smem>>) -> (i32, i32) {
    %c0_i32 = arith.constant 0 : i32
    %c0_i32_0 = arith.constant 0 : i32
    %c0_i32_1 = arith.constant 0 : i32
    return %c0_i32, %c0_i32_0 : i32, i32
  }
  func.func @transform_16(%arg0: i32, %arg1: memref<16xi32, #tpu.memory_space<smem>>) -> (i32, i32) {
    %c0_i32 = arith.constant 0 : i32
    %c0_i32_0 = arith.constant 0 : i32
    %c0_i32_1 = arith.constant 0 : i32
    return %c0_i32, %c0_i32_0 : i32, i32
  }
  func.func @transform_17(%arg0: i32, %arg1: memref<16xi32, #tpu.memory_space<smem>>) -> (i32, i32) {
    %c0_i32 = arith.constant 0 : i32
    %c0_i32_0 = arith.constant 0 : i32
    %c0_i32_1 = arith.constant 0 : i32
    return %c0_i32, %c0_i32_0 : i32, i32
  }
  func.func @transform_18(%arg0: i32, %arg1: memref<16xi32, #tpu.memory_space<smem>>) -> (i32, i32) {
    %c0_i32 = arith.constant 0 : i32
    %c0_i32_0 = arith.constant 0 : i32
    %c0_i32_1 = arith.constant 0 : i32
    return %c0_i32, %c0_i32_0 : i32, i32
  }
  func.func @transform_19(%arg0: i32, %arg1: memref<16xi32, #tpu.memory_space<smem>>) -> (i32, i32) {
    %c0_i32 = arith.constant 0 : i32
    %c0_i32_0 = arith.constant 0 : i32
    return %arg0, %c0_i32 : i32, i32
  }
}

</mosaic_0001>

<llo_original>
// kernel: tpu_custom_call.1
$region0: #{tpu_custom_call.1}
  #allocation0 [shape = 'u32[]', space=smem, size = 0x4, offset = 0x4, fixed_abs, tag = 'smem constant byte address 0x4 - core index']
  #allocation1 [shape = 'u32[144,128]{1,0:T(1,128)}', space=vmem, size = 0x12000, scoped, tag = 'internal scratch']
  #allocation2 [shape = 'f32[16,32]{1,0:T(8,128)}', space=vmem, size = 0x2000, scoped, tag = 'scratch operand']
  #allocation3 [shape = 's32[1]{0}', space=sflag, size = 0x4, scoped, tag = 'scoped memory for tpu_custom_call.1']
  #allocation4 [shape = 'u8[512]{0}', space=smem, size = 0x200, scoped, tag = 'prefetched SMEM operand 0']
  #allocation5 [shape = 'f32[1,1]{1,0:T(1,128)S(1)}', space=vmem, size = 0x200, scoped, tag = 'scoped memory for tpu_custom_call.1']
  %s0 = inlined_call_operand.vmem [shape: s32[16], index: 0, kind: input, shape index: {}]
  %s1 = inlined_call_operand.vmem [shape: f32[2,32], index: 1, kind: input, shape index: {}]
  %s2 = inlined_call_operand.vmem [shape: f32[2,6,16], index: 2, kind: input, shape index: {}]
  %s3 = inlined_call_operand.vmem [shape: f32[2,96], index: 3, kind: input, shape index: {}]
  %s4 = inlined_call_operand.vmem [shape: s32[2,8], index: 4, kind: input, shape index: {}]
  %s5 = inlined_call_operand.vmem [shape: f32[24,32], index: 5, kind: input, shape index: {}]
  %s6 = inlined_call_operand.vmem [shape: f32[32,32], index: 6, kind: input, shape index: {}]
  %s7 = inlined_call_operand.vmem [shape: f32[1,32], index: 7, kind: input, shape index: {}]
  %s8 = inlined_call_operand.vmem [shape: f32[96,32], index: 8, kind: input, shape index: {}]
  %s9 = inlined_call_operand.vmem [shape: f32[1,32], index: 9, kind: input, shape index: {}]
  %s10 = inlined_call_operand.vmem [shape: f32[32,32], index: 10, kind: input, shape index: {}]
  %s11 = inlined_call_operand.vmem [shape: f32[1,32], index: 11, kind: input, shape index: {}]
  %s12 = inlined_call_operand.vmem [shape: f32[32,32], index: 12, kind: input, shape index: {}]
  %s13 = inlined_call_operand.vmem [shape: f32[1,32], index: 13, kind: input, shape index: {}]
  %s14 = inlined_call_operand.vmem [shape: f32[32,16], index: 14, kind: input, shape index: {}]
  %s15 = inlined_call_operand.vmem [shape: f32[1,16], index: 15, kind: input, shape index: {}]
  %s16 = inlined_call_operand.vmem [shape: f32[1,16], index: 16, kind: input, shape index: {}]
  %s17 = inlined_call_operand.<no memory space> [shape: f32[1,1], index: 17, kind: input, shape index: {}]
  %s18 = inlined_call_operand.vmem [shape: f32[16,32], index: 18, kind: input, shape index: {}]
  %s19 = inlined_call_operand.vmem [shape: f32[1,32], index: 19, kind: input, shape index: {}]
  %s20 = inlined_call_operand.hbm [shape: f32[2,6], index: 20, kind: output, shape index: {}]
  %s21 = sld [smem:[#allocation0]]
  $region86: #{tpu_custom_call.1} parent=0
    _
  %s23 = ssub.s32 1, %s21
  %s24 = scalar_select 0, %s23, %s21
  %s25 = sshll.u32 %s0, 4
  %s26 = int_to_ptr.vmem [resolvable:$true] %s25
  %28 = dma.vmem_to_smem %s26, 16, [#allocation4], [#allocation3]
  %v29 = vstv %s17
  %30 = vst [vmem:[#allocation5] sm:$0x1] %v29
  %31 = dma.done [#allocation3], 16
  %32 = sfence
  $region1: #{tpu_custom_call.1} parent=0
    #allocation6 [shape = 'u8[1024]{0}', space=vmem, size = 0x400, scoped, tag = 'output window, operand 0, single buffered']
    #allocation7 [shape = 's32[1]{0}', space=sflag, size = 0x4, scoped, tag = 'scoped memory for tpu_custom_call.1']
    %33 = vsyncpa [#allocation7], 0
    // Predicated region
    $region2: #{tpu_custom_call.1} parent=1 // pred_check
      _
    $region3: #{tpu_custom_call.1} parent=1 // pred_check_branch
      %35 = sbr.rel (0) target = $region5
    $region4: #{tpu_custom_call.1} parent=1 // pred_region
      _
    $region5: #{tpu_custom_call.1} parent=1 // pred_fallthru
      _
    // Predicated region
    $region6: #{tpu_custom_call.1} parent=1 // pred_check
      _
    $region7: #{tpu_custom_call.1} parent=1 // pred_check_branch
      %37 = sbr.rel (0) target = $region9
    $region8: #{tpu_custom_call.1} parent=1 // pred_region
      _
    $region9: #{tpu_custom_call.1} parent=1 // pred_fallthru
      _
    // Predicated region
    $region10: #{tpu_custom_call.1} parent=1 // pred_check
      _
    $region11: #{tpu_custom_call.1} parent=1 // pred_check_branch
      %39 = sbr.rel (0) target = $region13
    $region12: #{tpu_custom_call.1} parent=1 // pred_region
      _
    $region13: #{tpu_custom_call.1} parent=1 // pred_fallthru
      _
    // Predicated region
    $region14: #{tpu_custom_call.1} parent=1 // pred_check
      _
    $region15: #{tpu_custom_call.1} parent=1 // pred_check_branch
      %41 = sbr.rel (0) target = $region17
    $region16: #{tpu_custom_call.1} parent=1 // pred_region
      _
    $region17: #{tpu_custom_call.1} parent=1 // pred_fallthru
      _
    // Predicated region
    $region18: #{tpu_custom_call.1} parent=1 // pred_check
      _
    $region19: #{tpu_custom_call.1} parent=1 // pred_check_branch
      %43 = sbr.rel (0) target = $region21
    $region20: #{tpu_custom_call.1} parent=1 // pred_region
      _
    $region21: #{tpu_custom_call.1} parent=1 // pred_fallthru
      _
    // Predicated region
    $region22: #{tpu_custom_call.1} parent=1 // pred_check
      _
    $region23: #{tpu_custom_call.1} parent=1 // pred_check_branch
      %45 = sbr.rel (0) target = $region25
    $region24: #{tpu_custom_call.1} parent=1 // pred_region
      _
    $region25: #{tpu_custom_call.1} parent=1 // pred_fallthru
      _
    // Predicated region
    $region26: #{tpu_custom_call.1} parent=1 // pred_check
      _
    $region27: #{tpu_custom_call.1} parent=1 // pred_check_branch
      %47 = sbr.rel (0) target = $region29
    $region28: #{tpu_custom_call.1} parent=1 // pred_region
      _
    $region29: #{tpu_custom_call.1} parent=1 // pred_fallthru
      _
    // Predicated region
    $region30: #{tpu_custom_call.1} parent=1 // pred_check
      _
    $region31: #{tpu_custom_call.1} parent=1 // pred_check_branch
      %49 = sbr.rel (0) target = $region33
    $region32: #{tpu_custom_call.1} parent=1 // pred_region
      _
    $region33: #{tpu_custom_call.1} parent=1 // pred_fallthru
      _
    // Predicated region
    $region34: #{tpu_custom_call.1} parent=1 // pred_check
      _
    $region35: #{tpu_custom_call.1} parent=1 // pred_check_branch
      %51 = sbr.rel (0) target = $region37
    $region36: #{tpu_custom_call.1} parent=1 // pred_region
      _
    $region37: #{tpu_custom_call.1} parent=1 // pred_fallthru
      _
    // Predicated region
    $region38: #{tpu_custom_call.1} parent=1 // pred_check
      _
    $region39: #{tpu_custom_call.1} parent=1 // pred_check_branch
      %53 = sbr.rel (0) target = $region41
    $region40: #{tpu_custom_call.1} parent=1 // pred_region
      _
    $region41: #{tpu_custom_call.1} parent=1 // pred_fallthru
      _
    // Predicated region
    $region42: #{tpu_custom_call.1} parent=1 // pred_check
      _
    $region43: #{tpu_custom_call.1} parent=1 // pred_check_branch
      %55 = sbr.rel (0) target = $region45
    $region44: #{tpu_custom_call.1} parent=1 // pred_region
      _
    $region45: #{tpu_custom_call.1} parent=1 // pred_fallthru
      _
    // Predicated region
    $region46: #{tpu_custom_call.1} parent=1 // pred_check
      _
    $region47: #{tpu_custom_call.1} parent=1 // pred_check_branch
      %57 = sbr.rel (0) target = $region49
    $region48: #{tpu_custom_call.1} parent=1 // pred_region
      _
    $region49: #{tpu_custom_call.1} parent=1 // pred_fallthru
      _
    // Predicated region
    $region50: #{tpu_custom_call.1} parent=1 // pred_check
      _
    $region51: #{tpu_custom_call.1} parent=1 // pred_check_branch
      %59 = sbr.rel (0) target = $region53
    $region52: #{tpu_custom_call.1} parent=1 // pred_region
      _
    $region53: #{tpu_custom_call.1} parent=1 // pred_fallthru
      _
    // Predicated region
    $region54: #{tpu_custom_call.1} parent=1 // pred_check
      _
    $region55: #{tpu_custom_call.1} parent=1 // pred_check_branch
      %61 = sbr.rel (0) target = $region57
    $region56: #{tpu_custom_call.1} parent=1 // pred_region
      _
    $region57: #{tpu_custom_call.1} parent=1 // pred_fallthru
      _
    // Predicated region
    $region58: #{tpu_custom_call.1} parent=1 // pred_check
      _
    $region59: #{tpu_custom_call.1} parent=1 // pred_check_branch
      %63 = sbr.rel (0) target = $region61
    $region60: #{tpu_custom_call.1} parent=1 // pred_region
      _
    $region61: #{tpu_custom_call.1} parent=1 // pred_fallthru
      _
    // Predicated region
    $region62: #{tpu_custom_call.1} parent=1 // pred_check
      _
    $region63: #{tpu_custom_call.1} parent=1 // pred_check_branch
      %65 = sbr.rel (0) target = $region65
    $region64: #{tpu_custom_call.1} parent=1 // pred_region
      _
    $region65: #{tpu_custom_call.1} parent=1 // pred_fallthru
      _
    // Predicated region
    $region66: #{tpu_custom_call.1} parent=1 // pred_check
      _
    $region67: #{tpu_custom_call.1} parent=1 // pred_check_branch
      %67 = sbr.rel (0) target = $region69
    $region68: #{tpu_custom_call.1} parent=1 // pred_region
      _
    $region69: #{tpu_custom_call.1} parent=1 // pred_fallthru
      _
    // Predicated region
    $region70: #{tpu_custom_call.1} parent=1 // pred_check
      _
    $region71: #{tpu_custom_call.1} parent=1 // pred_check_branch
      %69 = sbr.rel (0) target = $region73
    $region72: #{tpu_custom_call.1} parent=1 // pred_region
      _
    $region73: #{tpu_custom_call.1} parent=1 // pred_fallthru
      _
    // Predicated region
    $region74: #{tpu_custom_call.1} parent=1 // pred_check
      _
    $region75: #{tpu_custom_call.1} parent=1 // pred_check_branch
      %71 = sbr.rel (0) target = $region77
    $region76: #{tpu_custom_call.1} parent=1 // pred_region
      _
    $region77: #{tpu_custom_call.1} parent=1 // pred_fallthru
      _
    %s73 = smul.u32 0, 16
    %s74 = sld [smem:[#allocation4 + %s73]]
    %s75 = scalar_lea.vmem %s5, %s74
    %v76 = vld [vmem:[%s75] sm:$0x1]
    %vm77 = vcmask 253952
    %78 = vst.msk [vmem:[#allocation2] sm:$0x1] %vm77, %v76
    %s79 = sadd.s32 %s73, 1
    %s80 = sld [smem:[#allocation4 + %s79]]
    %s81 = scalar_lea.vmem %s5, %s80
    %v82 = vld [vmem:[%s81] sm:$0x1]
    %83 = vst.msk [vmem:[#allocation2 + $0x1] sm:$0x1] %vm77, %v82
    %s84 = sadd.s32 %s73, 2
    %s85 = sld [smem:[#allocation4 + %s84]]
    %s86 = scalar_lea.vmem %s5, %s85
    %v87 = vld [vmem:[%s86] sm:$0x1]
    %88 = vst.msk [vmem:[#allocation2 + $0x2] sm:$0x1] %vm77, %v87
    %s89 = sadd.s32 %s73, 3
    %s90 = sld [smem:[#allocation4 + %s89]]
    %s91 = scalar_lea.vmem %s5, %s90
    %v92 = vld [vmem:[%s91] sm:$0x1]
    %93 = vst.msk [vmem:[#allocation2 + $0x3] sm:$0x1] %vm77, %v92
    %s94 = sadd.s32 %s73, 4
    %s95 = sld [smem:[#allocation4 + %s94]]
    %s96 = scalar_lea.vmem %s5, %s95
    %v97 = vld [vmem:[%s96] sm:$0x1]
    %98 = vst.msk [vmem:[#allocation2 + $0x4] sm:$0x1] %vm77, %v97
    %s99 = sadd.s32 %s73, 5
    %s100 = sld [smem:[#allocation4 + %s99]]
    %s101 = scalar_lea.vmem %s5, %s100
    %v102 = vld [vmem:[%s101] sm:$0x1]
    %103 = vst.msk [vmem:[#allocation2 + $0x5] sm:$0x1] %vm77, %v102
    %s104 = sadd.s32 %s73, 6
    %s105 = sld [smem:[#allocation4 + %s104]]
    %s106 = scalar_lea.vmem %s5, %s105
    %v107 = vld [vmem:[%s106] sm:$0x1]
    %108 = vst.msk [vmem:[#allocation2 + $0x6] sm:$0x1] %vm77, %v107
    %s109 = sadd.s32 %s73, 7
    %s110 = sld [smem:[#allocation4 + %s109]]
    %s111 = scalar_lea.vmem %s5, %s110
    %v112 = vld [vmem:[%s111] sm:$0x1]
    %113 = vst.msk [vmem:[#allocation2 + $0x7] sm:$0x1] %vm77, %v112
    %s114 = sadd.s32 %s73, 8
    %s115 = sld [smem:[#allocation4 + %s114]]
    %s116 = scalar_lea.vmem %s5, %s115
    %v117 = vld [vmem:[%s116] sm:$0x1]
    %118 = vst.msk [vmem:[#allocation2 + $0x8] sm:$0x1] %vm77, %v117
    %s119 = sadd.s32 %s73, 9
    %s120 = sld [smem:[#allocation4 + %s119]]
    %s121 = scalar_lea.vmem %s5, %s120
    %v122 = vld [vmem:[%s121] sm:$0x1]
    %123 = vst.msk [vmem:[#allocation2 + $0x9] sm:$0x1] %vm77, %v122
    %s124 = sadd.s32 %s73, 10
    %s125 = sld [smem:[#allocation4 + %s124]]
    %s126 = scalar_lea.vmem %s5, %s125
    %v127 = vld [vmem:[%s126] sm:$0x1]
    %128 = vst.msk [vmem:[#allocation2 + $0xa] sm:$0x1] %vm77, %v127
    %s129 = sadd.s32 %s73, 11
    %s130 = sld [smem:[#allocation4 + %s129]]
    %s131 = scalar_lea.vmem %s5, %s130
    %v132 = vld [vmem:[%s131] sm:$0x1]
    %133 = vst.msk [vmem:[#allocation2 + $0xb] sm:$0x1] %vm77, %v132
    %s134 = sadd.s32 %s73, 12
    %s135 = sld [smem:[#allocation4 + %s134]]
    %s136 = scalar_lea.vmem %s5, %s135
    %v137 = vld [vmem:[%s136] sm:$0x1]
    %138 = vst.msk [vmem:[#allocation2 + $0xc] sm:$0x1] %vm77, %v137
    %s139 = sadd.s32 %s73, 13
    %s140 = sld [smem:[#allocation4 + %s139]]
    %s141 = scalar_lea.vmem %s5, %s140
    %v142 = vld [vmem:[%s141] sm:$0x1]
    %143 = vst.msk [vmem:[#allocation2 + $0xd] sm:$0x1] %vm77, %v142
    %s144 = sadd.s32 %s73, 14
    %s145 = sld [smem:[#allocation4 + %s144]]
    %s146 = scalar_lea.vmem %s5, %s145
    %v147 = vld [vmem:[%s146] sm:$0x1]
    %148 = vst.msk [vmem:[#allocation2 + $0xe] sm:$0x1] %vm77, %v147
    %s149 = sadd.s32 %s73, 15
    %s150 = sld [smem:[#allocation4 + %s149]]
    %s151 = scalar_lea.vmem %s5, %s150
    %v152 = vld [vmem:[%s151] sm:$0x1]
    %153 = vst.msk [vmem:[#allocation2 + $0xf] sm:$0x1] %vm77, %v152
    %v154 = vld [vmem:[%s3] sm:$0x3]
    %vm155 = vcmask 779264
    %v156 = vsel %vm155, %v154, 0.0
    %157 = vadd.xlane.f32.xlu0 %v156
    %v158 = vpop.xlane.xlu0 %157
    %v159 = vrcp.pop 96.0
    %v160 = vmul.f32 %v158, %v159
    %v161 = vmul.f32 %v154, %v154
    %v162 = vsel %vm155, %v161, 0.0
    %163 = vadd.xlane.f32.xlu0 %v162
    %v164 = vpop.xlane.xlu0 %163
    %v165 = vmul.f32 %v164, %v159
    %v166 = vmul.f32 %v160, %v160
    %v167 = vsub.f32 %v165, %v166
    %v168 = vmul.f32 %v167, 1.0105263
    %v169 = vmax.f32 %v168, 0.0
    %v170 = vsub.f32 %v154, %v160
    %v171 = vrsqrt.pop %v169
    %v172 = vmul.f32 %v170, %v171
    %v173 = vld [vmem:[%s1] sm:$0x3]
    %vm174 = vcmask 254976
    %v175 = vsel %vm174, %v173, 0.0
    %176 = vadd.xlane.f32.xlu0 %v175
    %v177 = vpop.xlane.xlu0 %176
    %v178 = vrcp.pop 32.0
    %v179 = vmul.f32 %v177, %v178
    %v180 = vmul.f32 %v173, %v173
    %v181 = vsel %vm174, %v180, 0.0
    %182 = vadd.xlane.f32.xlu0 %v181
    %v183 = vpop.xlane.xlu0 %182
    %v184 = vmul.f32 %v183, %v178
    %v185 = vmul.f32 %v179, %v179
    %v186 = vsub.f32 %v184, %v185
    %v187 = vmul.f32 %v186, 1.032258
    %v188 = vmax.f32 %v187, 0.0
    %v189 = vsub.f32 %v173, %v179
    %v190 = vrsqrt.pop %v188
    %v191 = vmul.f32 %v189, %v190
    %v192 = vld [vmem:[%s2] sm:$0x3f]
    %v193 = vld [vmem:[%s2 + $0x8] sm:$0x3f]
    %v196 = vcombine.high %v192, %v192
    %v198 = vunpack.c.l.s4 1983009808
    %v199 = vunpack.c.0.s8 %v198
    %v200 = vlaneseq
    %v201 = vshrl.u32 %v200, 7
    %v202 = vsub.s32 %v199, %v201
    %v203 = vrot.slane %v192, %v202
    %v205 = vunpack.c.l.s4 1983009808
    %v206 = vunpack.c.0.s8 %v205
    %v207 = vlaneseq
    %v208 = vshrl.u32 %v207, 7
    %v209 = vsub.s32 %v206, %v208
    %v210 = vrot.slane %v196, %v209
    %v211 = vcombine.high %v203, %v203
    %v212 = vcombine.high %v193, %v193
    %v214 = vunpack.c.l.s4 1983009808
    %v215 = vunpack.c.0.s8 %v214
    %v216 = vlaneseq
    %v217 = vshrl.u32 %v216, 7
    %v218 = vsub.s32 %v215, %v217
    %v219 = vrot.slane %v193, %v218
    %v221 = vunpack.c.l.s4 1983009808
    %v222 = vunpack.c.0.s8 %v221
    %v223 = vlaneseq
    %v224 = vshrl.u32 %v223, 7
    %v225 = vsub.s32 %v222, %v224
    %v226 = vrot.slane %v212, %v225
    %v227 = vcombine.high %v219, %v219
    %v234 = vcombine.low %v203, %v211
    %v235 = vcombine.low %v210, %v219
    %v237 = vunpack.c.l.s4 1983009808
    %v238 = vunpack.c.0.s8 %v237
    %v239 = vlaneseq
    %v240 = vshrl.u32 %v239, 7
    %v241 = vsub.s32 %v238, %v240
    %v242 = vrot.slane %v234, %v241
    %v244 = vunpack.c.l.s4 1983009808
    %v245 = vunpack.c.0.s8 %v244
    %v246 = vlaneseq
    %v247 = vshrl.u32 %v246, 7
    %v248 = vsub.s32 %v245, %v247
    %v249 = vrot.slane %v235, %v248
    %v250 = vcombine.low %v242, %v249
    %v251 = vcombine.low %v227, %v226
    %v253 = vunpack.c.l.s4 1983009808
    %v254 = vunpack.c.0.s8 %v253
    %v255 = vlaneseq
    %v256 = vshrl.u32 %v255, 7
    %v257 = vsub.s32 %v254, %v256
    %v258 = vrot.slane %v251, %v257
    %vm261 = vcmask 130048
    %v262 = vsel %vm261, %v250, 0.0
    %263 = vadd.xlane.f32.xlu0 %v262
    %v264 = vpop.xlane.xlu0 %263
    %vm265 = vcmask 125952
    %v266 = vsel %vm265, %v258, 0.0
    %267 = vadd.xlane.f32.xlu0 %v266
    %v268 = vpop.xlane.xlu0 %267
    %v269 = vrcp.pop 16.0
    %v270 = vmul.f32 %v264, %v269
    %v271 = vmul.f32 %v268, %v269
    %v272 = vmul.f32 %v203, %v203
    %v273 = vmul.f32 %v211, %v211
    %v274 = vmul.f32 %v210, %v210
    %v275 = vmul.f32 %v219, %v219
    %v276 = vmul.f32 %v227, %v227
    %v277 = vmul.f32 %v226, %v226
    %v284 = vcombine.low %v272, %v273
    %v285 = vcombine.low %v274, %v275
    %v287 = vunpack.c.l.s4 1983009808
    %v288 = vunpack.c.0.s8 %v287
    %v289 = vlaneseq
    %v290 = vshrl.u32 %v289, 7
    %v291 = vsub.s32 %v288, %v290
    %v292 = vrot.slane %v284, %v291
    %v294 = vunpack.c.l.s4 1983009808
    %v295 = vunpack.c.0.s8 %v294
    %v296 = vlaneseq
    %v297 = vshrl.u32 %v296, 7
    %v298 = vsub.s32 %v295, %v297
    %v299 = vrot.slane %v285, %v298
    %v300 = vcombine.low %v292, %v299
    %v301 = vcombine.low %v276, %v277
    %v303 = vunpack.c.l.s4 1983009808
    %v304 = vunpack.c.0.s8 %v303
    %v305 = vlaneseq
    %v306 = vshrl.u32 %v305, 7
    %v307 = vsub.s32 %v304, %v306
    %v308 = vrot.slane %v301, %v307
    %v311 = vsel %vm261, %v300, 0.0
    %312 = vadd.xlane.f32.xlu0 %v311
    %v313 = vpop.xlane.xlu0 %312
    %v314 = vsel %vm265, %v308, 0.0
    %315 = vadd.xlane.f32.xlu0 %v314
    %v316 = vpop.xlane.xlu0 %315
    %v317 = vmul.f32 %v313, %v269
    %v318 = vmul.f32 %v316, %v269
    %v319 = vmul.f32 %v270, %v270
    %v320 = vmul.f32 %v271, %v271
    %v321 = vsub.f32 %v317, %v319
    %v322 = vsub.f32 %v318, %v320
    %v323 = vmul.f32 %v321, 1.0666667
    %v324 = vmul.f32 %v322, 1.0666667
    %v325 = vmax.f32 %v323, 0.0
    %v326 = vmax.f32 %v324, 0.0
    %v330 = vunpack.c.l.s4 269488144
    %v331 = vunpack.c.0.s8 %v330
    %v332 = vlaneseq
    %v333 = vshrl.u32 %v332, 7
    %v334 = vsub.s32 %v331, %v333
    %v335 = vrot.slane %v270, %v334
    %v337 = vunpack.c.l.s4 842150450
    %v338 = vunpack.c.0.s8 %v337
    %v339 = vlaneseq
    %v340 = vshrl.u32 %v339, 7
    %v341 = vsub.s32 %v338, %v340
    %v342 = vrot.slane %v270, %v341
    %v344 = vunpack.c.l.s4 1414812756
    %v345 = vunpack.c.0.s8 %v344
    %v346 = vlaneseq
    %v347 = vshrl.u32 %v346, 7
    %v348 = vsub.s32 %v345, %v347
    %v349 = vrot.slane %v270, %v348
    %v351 = vunpack.c.l.s4 1987475062
    %v352 = vunpack.c.0.s8 %v351
    %v353 = vlaneseq
    %v354 = vshrl.u32 %v353, 7
    %v355 = vsub.s32 %v352, %v354
    %v356 = vrot.slane %v270, %v355
    %v358 = vunpack.c.l.s4 269488144
    %v359 = vunpack.c.0.s8 %v358
    %v360 = vlaneseq
    %v361 = vshrl.u32 %v360, 7
    %v362 = vsub.s32 %v359, %v361
    %v363 = vrot.slane %v271, %v362
    %v365 = vunpack.c.l.s4 842150450
    %v366 = vunpack.c.0.s8 %v365
    %v367 = vlaneseq
    %v368 = vshrl.u32 %v367, 7
    %v369 = vsub.s32 %v366, %v368
    %v370 = vrot.slane %v271, %v369
    %v377 = vsub.f32 %v203, %v335
    %v378 = vsub.f32 %v211, %v342
    %v379 = vsub.f32 %v210, %v349
    %v380 = vsub.f32 %v219, %v356
    %v381 = vsub.f32 %v227, %v363
    %v382 = vsub.f32 %v226, %v370
    %v383 = vrsqrt.pop %v325
    %v384 = vrsqrt.pop %v326
    %v388 = vunpack.c.l.s4 269488144
    %v389 = vunpack.c.0.s8 %v388
    %v390 = vlaneseq
    %v391 = vshrl.u32 %v390, 7
    %v392 = vsub.s32 %v389, %v391
    %v393 = vrot.slane %v383, %v392
    %v395 = vunpack.c.l.s4 842150450
    %v396 = vunpack.c.0.s8 %v395
    %v397 = vlaneseq
    %v398 = vshrl.u32 %v397, 7
    %v399 = vsub.s32 %v396, %v398
    %v400 = vrot.slane %v383, %v399
    %v402 = vunpack.c.l.s4 1414812756
    %v403 = vunpack.c.0.s8 %v402
    %v404 = vlaneseq
    %v405 = vshrl.u32 %v404, 7
    %v406 = vsub.s32 %v403, %v405
    %v407 = vrot.slane %v383, %v406
    %v409 = vunpack.c.l.s4 1987475062
    %v410 = vunpack.c.0.s8 %v409
    %v411 = vlaneseq
    %v412 = vshrl.u32 %v411, 7
    %v413 = vsub.s32 %v410, %v412
    %v414 = vrot.slane %v383, %v413
    %v416 = vunpack.c.l.s4 269488144
    %v417 = vunpack.c.0.s8 %v416
    %v418 = vlaneseq
    %v419 = vshrl.u32 %v418, 7
    %v420 = vsub.s32 %v417, %v419
    %v421 = vrot.slane %v384, %v420
    %v423 = vunpack.c.l.s4 842150450
    %v424 = vunpack.c.0.s8 %v423
    %v425 = vlaneseq
    %v426 = vshrl.u32 %v425, 7
    %v427 = vsub.s32 %v424, %v426
    %v428 = vrot.slane %v384, %v427
    %v435 = vmul.f32 %v377, %v393
    %v436 = vmul.f32 %v378, %v400
    %v437 = vmul.f32 %v379, %v407
    %v438 = vmul.f32 %v380, %v414
    %v439 = vmul.f32 %v381, %v421
    %v440 = vmul.f32 %v382, %v428
    %v441 = vld [vmem:[%s8] sm:$0xff]
    %v442 = vld [vmem:[%s8 + $0x8] sm:$0xff]
    %v443 = vld [vmem:[%s8 + $0x10] sm:$0xff]
    %v444 = vld [vmem:[%s8 + $0x18] sm:$0xff]
    %v445 = vld [vmem:[%s8 + $0x20] sm:$0xff]
    %v446 = vld [vmem:[%s8 + $0x28] sm:$0xff]
    %v447 = vld [vmem:[%s8 + $0x30] sm:$0xff]
    %v448 = vld [vmem:[%s8 + $0x38] sm:$0xff]
    %v449 = vld [vmem:[%s8 + $0x40] sm:$0xff]
    %v450 = vld [vmem:[%s8 + $0x48] sm:$0xff]
    %v451 = vld [vmem:[%s8 + $0x50] sm:$0xff]
    %v452 = vld [vmem:[%s8 + $0x58] sm:$0xff]
    %v453 = vpack.c.bf16 %v172, %v172
    %v454 = vpack.c.bf16 %v442, %v441
    %v455 = vpack.c.bf16 %v444, %v443
    %v456 = vpack.c.bf16 %v446, %v445
    %v457 = vpack.c.bf16 %v448, %v447
    %v458 = vpack.c.bf16 %v450, %v449
    %v459 = vpack.c.bf16 %v452, %v451
    %v460 = vld [vmem:[%s9] sm:$0x1]
    %v462 = vlaneseq
    %v463 = vshrl.u32 %v462, 7
    %v464 = vsub.s32 0, %v463
    %v465 = vrot.slane %v460, %v464
    %vm467 = vcmask 785408
    %v469 = vsel %vm467, %v453, 0
    %471 = vmatprep.subr.bf16.mxu0 0
    %472 = vmatpush1.bf16.msra.mxu0 %v454
    %473 = vmatprep.subr.bf16.mxu0 0
    %474 = vmatpush1.bf16.msra.mxu0 %v455
    %475 = vmatprep.subr.bf16.mxu0 0
    %476 = vmatpush1.bf16.msra.mxu0 %v456
    %477 = vmatprep.subr.bf16.mxu0 0
    %478 = vmatpush1.bf16.msra.mxu0 %v457
    %479 = vmatprep.subr.bf16.mxu0 0
    %480 = vmatpush1.bf16.msra.mxu0 %v458
    %481 = vmatprep.subr.bf16.mxu0 0
    %482 = vmatpush1.bf16.msra.mxu0 %v459
    %483 = vmatprep.subr.bf16.mxu0 0
    %484 = vmatpush1.bf16.msra.mxu0 0
    %485 = vmatprep.subr.bf16.mxu0 0
    %486 = vmatpush1.bf16.msra.mxu0 0
    %487 = vmatprep.subr.bf16.mxu0 0
    %488 = vmatpush1.bf16.msra.mxu0 0
    %489 = vmatprep.subr.bf16.mxu0 0
    %490 = vmatpush1.bf16.msra.mxu0 0
    %491 = vmatprep.subr.bf16.mxu0 0
    %492 = vmatpush1.bf16.msra.mxu0 0
    %493 = vmatprep.subr.bf16.mxu0 0
    %494 = vmatpush1.bf16.msra.mxu0 0
    %495 = vmatprep.subr.bf16.mxu0 0
    %496 = vmatpush1.bf16.msra.mxu0 0
    %497 = vmatprep.subr.bf16.mxu0 0
    %498 = vmatpush1.bf16.msra.mxu0 0
    %499 = vmatprep.subr.bf16.mxu0 0
    %500 = vmatpush1.bf16.msra.mxu0 0
    %501 = vmatprep.subr.bf16.mxu0 0
    %502 = vmatpush1.bf16.msra.mxu0 0
    %503 = vmatprep.mubr.bf16.mxu0 0
    %504 = vmatmul.mubr.bf16.gmra.mrb[0].mxu0 %v469
    %v505 = vpop.f32.mrb[0].mxu0
    %v506 = vadd.f32 %v465, %v505
    %v507 = vpop.f32.mrb[0].mxu0
    %v508 = vpop.f32.mrb[0].mxu0
    %v509 = vpop.f32.mrb[0].mxu0
    %510 = vdwg.mxu0
    %vm511 = vcmp.gt.f32.partialorder %v506, 0.0
    %v512 = vmul.f32 %v506, 0.01
    %v513 = vsel %vm511, %v506, %v512
    %v514 = vld [vmem:[%s10] sm:$0xff]
    %v515 = vld [vmem:[%s10 + $0x8] sm:$0xff]
    %v516 = vld [vmem:[%s10 + $0x10] sm:$0xff]
    %v517 = vld [vmem:[%s10 + $0x18] sm:$0xff]
    %v518 = vpack.c.bf16 %v513, %v513
    %v519 = vpack.c.bf16 %v515, %v514
    %v520 = vpack.c.bf16 %v517, %v516
    %v521 = vld [vmem:[%s11] sm:$0x1]
    %v523 = vlaneseq
    %v524 = vshrl.u32 %v523, 7
    %v525 = vsub.s32 0, %v524
    %v526 = vrot.slane %v521, %v525
    %vm528 = vcmask 261120
    %v530 = vsel %vm528, %v518, 0
    %532 = vmatprep.subr.bf16.mxu0 0
    %533 = vmatpush1.bf16.msra.mxu0 %v519
    %534 = vmatprep.subr.bf16.mxu0 0
    %535 = vmatpush1.bf16.msra.mxu0 %v520
    %536 = vmatprep.subr.bf16.mxu0 0
    %537 = vmatpush1.bf16.msra.mxu0 0
    %538 = vmatprep.subr.bf16.mxu0 0
    %539 = vmatpush1.bf16.msra.mxu0 0
    %540 = vmatprep.subr.bf16.mxu0 0
    %541 = vmatpush1.bf16.msra.mxu0 0
    %542 = vmatprep.subr.bf16.mxu0 0
    %543 = vmatpush1.bf16.msra.mxu0 0
    %544 = vmatprep.subr.bf16.mxu0 0
    %545 = vmatpush1.bf16.msra.mxu0 0
    %546 = vmatprep.subr.bf16.mxu0 0
    %547 = vmatpush1.bf16.msra.mxu0 0
    %548 = vmatprep.subr.bf16.mxu0 0
    %549 = vmatpush1.bf16.msra.mxu0 0
    %550 = vmatprep.subr.bf16.mxu0 0
    %551 = vmatpush1.bf16.msra.mxu0 0
    %552 = vmatprep.subr.bf16.mxu0 0
    %553 = vmatpush1.bf16.msra.mxu0 0
    %554 = vmatprep.subr.bf16.mxu0 0
    %555 = vmatpush1.bf16.msra.mxu0 0
    %556 = vmatprep.subr.bf16.mxu0 0
    %557 = vmatpush1.bf16.msra.mxu0 0
    %558 = vmatprep.subr.bf16.mxu0 0
    %559 = vmatpush1.bf16.msra.mxu0 0
    %560 = vmatprep.subr.bf16.mxu0 0
    %561 = vmatpush1.bf16.msra.mxu0 0
    %562 = vmatprep.subr.bf16.mxu0 0
    %563 = vmatpush1.bf16.msra.mxu0 0
    %564 = vmatprep.mubr.bf16.mxu0 0
    %565 = vmatmul.mubr.bf16.gmra.mrb[0].mxu0 %v530
    %v566 = vpop.f32.mrb[0].mxu0
    %v567 = vadd.f32 %v526, %v566
    %v568 = vpop.f32.mrb[0].mxu0
    %v569 = vpop.f32.mrb[0].mxu0
    %v570 = vpop.f32.mrb[0].mxu0
    %571 = vdwg.mxu0
    %vm572 = vcmp.gt.f32.partialorder %v567, 0.0
    %v573 = vmul.f32 %v567, 0.01
    %v574 = vsel %vm572, %v567, %v573
    %v575 = vsel %vm174, %v574, 0.0
    %576 = vadd.xlane.f32.xlu0 %v575
    %v577 = vpop.xlane.xlu0 %576
    %v578 = vmul.f32 %v577, %v178
    %v579 = vmul.f32 %v574, %v574
    %v580 = vsel %vm174, %v579, 0.0
    %581 = vadd.xlane.f32.xlu0 %v580
    %v582 = vpop.xlane.xlu0 %581
    %v583 = vmul.f32 %v582, %v178
    %v584 = vmul.f32 %v578, %v578
    %v585 = vsub.f32 %v583, %v584
    %v586 = vmul.f32 %v585, 1.032258
    %v587 = vmax.f32 %v586, 0.0
    %v588 = vsub.f32 %v574, %v578
    %v589 = vrsqrt.pop %v587
    %v590 = vmul.f32 %v588, %v589
    %v591 = vld [vmem:[#allocation2] sm:$0xff]
    %v592 = vld [vmem:[#allocation2 + $0x8] sm:$0xff]
    %v593 = vld [vmem:[%s6] sm:$0xff]
    %v594 = vld [vmem:[%s6 + $0x8] sm:$0xff]
    %v595 = vld [vmem:[%s6 + $0x10] sm:$0xff]
    %v596 = vld [vmem:[%s6 + $0x18] sm:$0xff]
    %v597 = vpack.c.bf16 %v592, %v591
    %v598 = vpack.c.bf16 %v594, %v593
    %v599 = vpack.c.bf16 %v596, %v595
    %v600 = vld [vmem:[%s7] sm:$0x1]
    %v602 = vlaneseq
    %v603 = vshrl.u32 %v602, 7
    %v604 = vsub.s32 0, %v603
    %v605 = vrot.slane %v600, %v604
    %v608 = vsel %vm528, %v597, 0
    %610 = vmatprep.subr.bf16.mxu0 0
    %611 = vmatpush1.bf16.msra.mxu0 %v598
    %612 = vmatprep.subr.bf16.mxu0 0
    %613 = vmatpush1.bf16.msra.mxu0 %v599
    %614 = vmatprep.subr.bf16.mxu0 0
    %615 = vmatpush1.bf16.msra.mxu0 0
    %616 = vmatprep.subr.bf16.mxu0 0
    %617 = vmatpush1.bf16.msra.mxu0 0
    %618 = vmatprep.subr.bf16.mxu0 0
    %619 = vmatpush1.bf16.msra.mxu0 0
    %620 = vmatprep.subr.bf16.mxu0 0
    %621 = vmatpush1.bf16.msra.mxu0 0
    %622 = vmatprep.subr.bf16.mxu0 0
    %623 = vmatpush1.bf16.msra.mxu0 0
    %624 = vmatprep.subr.bf16.mxu0 0
    %625 = vmatpush1.bf16.msra.mxu0 0
    %626 = vmatprep.subr.bf16.mxu0 0
    %627 = vmatpush1.bf16.msra.mxu0 0
    %628 = vmatprep.subr.bf16.mxu0 0
    %629 = vmatpush1.bf16.msra.mxu0 0
    %630 = vmatprep.subr.bf16.mxu0 0
    %631 = vmatpush1.bf16.msra.mxu0 0
    %632 = vmatprep.subr.bf16.mxu0 0
    %633 = vmatpush1.bf16.msra.mxu0 0
    %634 = vmatprep.subr.bf16.mxu0 0
    %635 = vmatpush1.bf16.msra.mxu0 0
    %636 = vmatprep.subr.bf16.mxu0 0
    %637 = vmatpush1.bf16.msra.mxu0 0
    %638 = vmatprep.subr.bf16.mxu0 0
    %639 = vmatpush1.bf16.msra.mxu0 0
    %640 = vmatprep.subr.bf16.mxu0 0
    %641 = vmatpush1.bf16.msra.mxu0 0
    %642 = vmatprep.mubr.bf16.mxu0 0
    %643 = vmatmul.mubr.bf16.gmra.mrb[0].mxu0 %v608
    %v644 = vpop.f32.mrb[0].mxu0
    %v645 = vadd.f32 %v605, %v644
    %v646 = vpop.f32.mrb[0].mxu0
    %v647 = vpop.f32.mrb[0].mxu0
    %v648 = vadd.f32 %v605, %v647
    %v649 = vpop.f32.mrb[0].mxu0
    %650 = vdwg.mxu0
    %vm651 = vcmp.gt.f32.partialorder %v645, 0.0
    %vm652 = vcmp.gt.f32.partialorder %v648, 0.0
    %v653 = vmul.f32 %v645, 0.01
    %v654 = vmul.f32 %v648, 0.01
    %v655 = vsel %vm651, %v645, %v653
    %v656 = vsel %vm652, %v648, %v654
    %v657 = vsel %vm528, %v655, 0.0
    %658 = vadd.xlane.f32.xlu0 %v657
    %v659 = vpop.xlane.xlu0 %658
    %v660 = vsel %vm528, %v656, 0.0
    %661 = vadd.xlane.f32.xlu0 %v660
    %v662 = vpop.xlane.xlu0 %661
    %v663 = vmul.f32 %v659, %v178
    %v664 = vmul.f32 %v662, %v178
    %v665 = vmul.f32 %v655, %v655
    %v666 = vmul.f32 %v656, %v656
    %v667 = vsel %vm528, %v665, 0.0
    %668 = vadd.xlane.f32.xlu0 %v667
    %v669 = vpop.xlane.xlu0 %668
    %v670 = vsel %vm528, %v666, 0.0
    %671 = vadd.xlane.f32.xlu0 %v670
    %v672 = vpop.xlane.xlu0 %671
    %v673 = vmul.f32 %v669, %v178
    %v674 = vmul.f32 %v672, %v178
    %v675 = vmul.f32 %v663, %v663
    %v676 = vmul.f32 %v664, %v664
    %v677 = vsub.f32 %v673, %v675
    %v678 = vsub.f32 %v674, %v676
    %v679 = vmul.f32 %v677, 1.032258
    %v680 = vmul.f32 %v678, 1.032258
    %v681 = vmax.f32 %v679, 0.0
    %v682 = vmax.f32 %v680, 0.0
    %v683 = vsub.f32 %v655, %v663
    %v684 = vsub.f32 %v656, %v664
    %v685 = vrsqrt.pop %v681
    %v686 = vrsqrt.pop %v682
    %v687 = vmul.f32 %v683, %v685
    %v688 = vmul.f32 %v684, %v686
    %v691 = vunpack.c.l.s4 1966171168
    %v692 = vunpack.c.0.s8 %v691
    %v693 = vlaneseq
    %v694 = vshrl.u32 %v693, 7
    %v695 = vsub.s32 %v692, %v694
    %v696 = vrot.slane %v590, %v695
    %v697 = vcombine.high %v696, %v696
    %v699 = vunpack.c.l.s4 1966171168
    %v700 = vunpack.c.0.s8 %v699
    %v701 = vlaneseq
    %v702 = vshrl.u32 %v701, 7
    %v703 = vsub.s32 %v700, %v702
    %v704 = vrot.slane %v696, %v703
    %v706 = vunpack.c.l.s4 1966171168
    %v707 = vunpack.c.0.s8 %v706
    %v708 = vlaneseq
    %v709 = vshrl.u32 %v708, 7
    %v710 = vsub.s32 %v707, %v709
    %v711 = vrot.slane %v697, %v710
    %v712 = vlaneseq
    %v713 = vshrl.u32 %v712, 7
    %v714 = vsub.s32 0, %v713
    %v715 = vrot.slane %v704, %v714
    %v716 = vlaneseq
    %v717 = vshrl.u32 %v716, 7
    %v718 = vsub.s32 0, %v717
    %v719 = vrot.slane %v711, %v718
    %v722 = vmul.f32 %v687, %v715
    %v723 = vmul.f32 %v688, %v719
    %v724 = vld [vmem:[%s12] sm:$0xff]
    %v725 = vld [vmem:[%s12 + $0x8] sm:$0xff]
    %v726 = vld [vmem:[%s12 + $0x10] sm:$0xff]
    %v727 = vld [vmem:[%s12 + $0x18] sm:$0xff]
    %v728 = vpack.c.bf16 %v723, %v722
    %v729 = vpack.c.bf16 %v725, %v724
    %v730 = vpack.c.bf16 %v727, %v726
    %v731 = vld [vmem:[%s13] sm:$0x1]
    %v733 = vlaneseq
    %v734 = vshrl.u32 %v733, 7
    %v735 = vsub.s32 0, %v734
    %v736 = vrot.slane %v731, %v735
    %v739 = vsel %vm528, %v728, 0
    %741 = vmatprep.subr.bf16.mxu0 0
    %742 = vmatpush1.bf16.msra.mxu0 %v729
    %743 = vmatprep.subr.bf16.mxu0 0
    %744 = vmatpush1.bf16.msra.mxu0 %v730
    %745 = vmatprep.subr.bf16.mxu0 0
    %746 = vmatpush1.bf16.msra.mxu0 0
    %747 = vmatprep.subr.bf16.mxu0 0
    %748 = vmatpush1.bf16.msra.mxu0 0
    %749 = vmatprep.subr.bf16.mxu0 0
    %750 = vmatpush1.bf16.msra.mxu0 0
    %751 = vmatprep.subr.bf16.mxu0 0
    %752 = vmatpush1.bf16.msra.mxu0 0
    %753 = vmatprep.subr.bf16.mxu0 0
    %754 = vmatpush1.bf16.msra.mxu0 0
    %755 = vmatprep.subr.bf16.mxu0 0
    %756 = vmatpush1.bf16.msra.mxu0 0
    %757 = vmatprep.subr.bf16.mxu0 0
    %758 = vmatpush1.bf16.msra.mxu0 0
    %759 = vmatprep.subr.bf16.mxu0 0
    %760 = vmatpush1.bf16.msra.mxu0 0
    %761 = vmatprep.subr.bf16.mxu0 0
    %762 = vmatpush1.bf16.msra.mxu0 0
    %763 = vmatprep.subr.bf16.mxu0 0
    %764 = vmatpush1.bf16.msra.mxu0 0
    %765 = vmatprep.subr.bf16.mxu0 0
    %766 = vmatpush1.bf16.msra.mxu0 0
    %767 = vmatprep.subr.bf16.mxu0 0
    %768 = vmatpush1.bf16.msra.mxu0 0
    %769 = vmatprep.subr.bf16.mxu0 0
    %770 = vmatpush1.bf16.msra.mxu0 0
    %771 = vmatprep.subr.bf16.mxu0 0
    %772 = vmatpush1.bf16.msra.mxu0 0
    %773 = vmatprep.mubr.bf16.mxu0 0
    %774 = vmatmul.mubr.bf16.gmra.mrb[0].mxu0 %v739
    %v775 = vpop.f32.mrb[0].mxu0
    %v776 = vadd.f32 %v736, %v775
    %v777 = vpop.f32.mrb[0].mxu0
    %v778 = vpop.f32.mrb[0].mxu0
    %v779 = vadd.f32 %v736, %v778
    %v780 = vpop.f32.mrb[0].mxu0
    %781 = vdwg.mxu0
    %v782 = vmax.f32 %v776, 0.0
    %v783 = vmax.f32 %v779, 0.0
    %v784 = vld [vmem:[%s14] sm:$0xff]
    %v785 = vld [vmem:[%s14 + $0x8] sm:$0xff]
    %v786 = vld [vmem:[%s14 + $0x10] sm:$0xff]
    %v787 = vld [vmem:[%s14 + $0x18] sm:$0xff]
    %v788 = vpack.c.bf16 %v783, %v782
    %v789 = vpack.c.bf16 %v785, %v784
    %v790 = vpack.c.bf16 %v787, %v786
    %v791 = vld [vmem:[%s15] sm:$0x1]
    %v793 = vlaneseq
    %v794 = vshrl.u32 %v793, 7
    %v795 = vsub.s32 0, %v794
    %v796 = vrot.slane %v791, %v795
    %v799 = vsel %vm528, %v788, 0
    %801 = vmatprep.subr.bf16.mxu0 0
    %802 = vmatpush1.bf16.msra.mxu0 %v789
    %803 = vmatprep.subr.bf16.mxu0 0
    %804 = vmatpush1.bf16.msra.mxu0 %v790
    %805 = vmatprep.subr.bf16.mxu0 0
    %806 = vmatpush1.bf16.msra.mxu0 0
    %807 = vmatprep.subr.bf16.mxu0 0
    %808 = vmatpush1.bf16.msra.mxu0 0
    %809 = vmatprep.subr.bf16.mxu0 0
    %810 = vmatpush1.bf16.msra.mxu0 0
    %811 = vmatprep.subr.bf16.mxu0 0
    %812 = vmatpush1.bf16.msra.mxu0 0
    %813 = vmatprep.subr.bf16.mxu0 0
    %814 = vmatpush1.bf16.msra.mxu0 0
    %815 = vmatprep.subr.bf16.mxu0 0
    %816 = vmatpush1.bf16.msra.mxu0 0
    %817 = vmatprep.subr.bf16.mxu0 0
    %818 = vmatpush1.bf16.msra.mxu0 0
    %819 = vmatprep.subr.bf16.mxu0 0
    %820 = vmatpush1.bf16.msra.mxu0 0
    %821 = vmatprep.subr.bf16.mxu0 0
    %822 = vmatpush1.bf16.msra.mxu0 0
    %823 = vmatprep.subr.bf16.mxu0 0
    %824 = vmatpush1.bf16.msra.mxu0 0
    %825 = vmatprep.subr.bf16.mxu0 0
    %826 = vmatpush1.bf16.msra.mxu0 0
    %827 = vmatprep.subr.bf16.mxu0 0
    %828 = vmatpush1.bf16.msra.mxu0 0
    %829 = vmatprep.subr.bf16.mxu0 0
    %830 = vmatpush1.bf16.msra.mxu0 0
    %831 = vmatprep.subr.bf16.mxu0 0
    %832 = vmatpush1.bf16.msra.mxu0 0
    %833 = vmatprep.mubr.bf16.mxu0 0
    %834 = vmatmul.mubr.bf16.gmra.mrb[0].mxu0 %v799
    %v835 = vpop.f32.mrb[0].mxu0
    %v836 = vadd.f32 %v796, %v835
    %v837 = vpop.f32.mrb[0].mxu0
    %v838 = vpop.f32.mrb[0].mxu0
    %v839 = vadd.f32 %v796, %v838
    %v840 = vpop.f32.mrb[0].mxu0
    %841 = vdwg.mxu0
    %vm842 = vcmp.gt.f32.partialorder %v836, 0.0
    %vm843 = vcmp.gt.f32.partialorder %v839, 0.0
    %v844 = vmul.f32 %v836, 0.01
    %v845 = vmul.f32 %v839, 0.01
    %v846 = vsel %vm842, %v836, %v844
    %v847 = vsel %vm843, %v839, %v845
    %v848 = vsel %vm261, %v846, 0.0
    %849 = vadd.xlane.f32.xlu0 %v848
    %v850 = vpop.xlane.xlu0 %849
    %v851 = vsel %vm261, %v847, 0.0
    %852 = vadd.xlane.f32.xlu0 %v851
    %v853 = vpop.xlane.xlu0 %852
    %v854 = vmul.f32 %v850, %v269
    %v855 = vmul.f32 %v853, %v269
    %v856 = vmul.f32 %v846, %v846
    %v857 = vmul.f32 %v847, %v847
    %v858 = vsel %vm261, %v856, 0.0
    %859 = vadd.xlane.f32.xlu0 %v858
    %v860 = vpop.xlane.xlu0 %859
    %v861 = vsel %vm261, %v857, 0.0
    %862 = vadd.xlane.f32.xlu0 %v861
    %v863 = vpop.xlane.xlu0 %862
    %v864 = vmul.f32 %v860, %v269
    %v865 = vmul.f32 %v863, %v269
    %v866 = vmul.f32 %v854, %v854
    %v867 = vmul.f32 %v855, %v855
    %v868 = vsub.f32 %v864, %v866
    %v869 = vsub.f32 %v865, %v867
    %v870 = vmul.f32 %v868, 1.0666667
    %v871 = vmul.f32 %v869, 1.0666667
    %v872 = vmax.f32 %v870, 0.0
    %v873 = vmax.f32 %v871, 0.0
    %v874 = vsub.f32 %v846, %v854
    %v875 = vsub.f32 %v847, %v855
    %v876 = vrsqrt.pop %v872
    %v877 = vrsqrt.pop %v873
    %v878 = vmul.f32 %v874, %v876
    %v879 = vmul.f32 %v875, %v877
    %v880 = vld [vmem:[%s16] sm:$0x1]
    %v882 = vlaneseq
    %v883 = vshrl.u32 %v882, 7
    %v884 = vsub.s32 0, %v883
    %v885 = vrot.slane %v880, %v884
    %v887 = vmul.f32 %v878, %v885
    %v888 = vmul.f32 %v879, %v885
    %v889 = vsel %vm261, %v887, 0.0
    %890 = vadd.xlane.f32.xlu0 %v889
    %v891 = vpop.xlane.xlu0 %890
    %v892 = vsel %vm261, %v888, 0.0
    %893 = vadd.xlane.f32.xlu0 %v892
    %v894 = vpop.xlane.xlu0 %893
    %v895 = vld [vmem:[#allocation5] sm:$0x1]
    %v897 = vlaneseq
    %v898 = vshrl.u32 %v897, 7
    %v899 = vsub.s32 0, %v898
    %v900 = vrot.slane %v895, %v899
    %901 = vset.pattern.permute.xlu0 0
    %902 = vperm.xlu0 %901, %v900
    %v903 = vpop.permute.xlu0 %902
    %v905 = vadd.f32 %v891, %v903
    %v906 = vadd.f32 %v894, %v903
    %v907 = vld [vmem:[%s4] sm:$0x3]
    %vm908 = vcmp.ne.s32.totalorder %v907, 0
    %v911 = vlaneseq
    %v912 = vand.u32 %v911, 127
    %v913 = vlaneseq
    %v914 = vshrl.u32 %v913, 7
    %v915 = vsub.s32 %v912, %v914
    %v916 = vrot.slane %v905, %v915
    %v917 = vlaneseq
    %v918 = vshrl.u32 %v917, 7
    %v919 = vsub.s32 %v912, %v918
    %v920 = vrot.slane %v906, %v919
    %vm921 = vcmask 1041409
    %v922 = vsel %vm921, %v920, %v916
    %v924 = vsel %vm908, -1e+30, %v922
    %vm925 = vcmask 58368
    %v926 = vsel %vm925, %v924, -inf
    %927 = vmax.xlane.f32.xlu0 %v926
    %v928 = vpop.xlane.xlu0 %927
    %v929 = vsub.f32 %v924, %v928
    %v930 = vmul.f32 %v929, 1.442695
    %v931 = vpow.pop %v930
    %v932 = vsel %vm925, %v931, 0.0
    %933 = vadd.xlane.f32.xlu0 %v932
    %v934 = vpop.xlane.xlu0 %933
    %v935 = vrcp.pop %v934
    %v936 = vmul.f32 %v931, %v935
    %v937 = vlaneseq
    %v938 = vshrl.u32 %v937, 7
    %v939 = vsub.s32 0, %v938
    %v940 = vrot.slane %v936, %v939
    %942 = vbcast.lane.b32.xlu0 %v940, 256
    %v943 = vpop.permute.xlu0 %942
    %v944 = vlaneseq
    %v945 = vshrl.u32 %v944, 7
    %v946 = vsub.s32 1, %v945
    %v947 = vrot.slane %v936, %v946
    %949 = vbcast.lane.b32.xlu0 %v947, 256
    %v950 = vpop.permute.xlu0 %949
    %v951 = vmul.f32 %v782, %v943
    %v952 = vmul.f32 %v783, %v950
    %v953 = vsel %vm528, %v951, 0.0
    %v954 = vrot.slane %v953, 4
    %v955 = vadd.f32 %v953, %v954
    %v956 = vrot.slane %v955, 2
    %v957 = vadd.f32 %v955, %v956
    %v958 = vrot.slane %v957, 1
    %v959 = vadd.f32 %v957, %v958
    %v960 = vsel %vm528, %v952, 0.0
    %v961 = vrot.slane %v960, 4
    %v962 = vadd.f32 %v960, %v961
    %v963 = vrot.slane %v962, 2
    %v964 = vadd.f32 %v962, %v963
    %v965 = vrot.slane %v964, 1
    %v966 = vadd.f32 %v964, %v965
    %v967 = vpack.c.bf16 %v191, %v191
    %v969 = vsel %vm528, %v967, 0
    %971 = vmatprep.subr.bf16.mxu0 0
    %972 = vmatpush1.bf16.msra.mxu0 %v598
    %973 = vmatprep.subr.bf16.mxu0 0
    %974 = vmatpush1.bf16.msra.mxu0 %v599
    %975 = vmatprep.subr.bf16.mxu0 0
    %976 = vmatpush1.bf16.msra.mxu0 0
    %977 = vmatprep.subr.bf16.mxu0 0
    %978 = vmatpush1.bf16.msra.mxu0 0
    %979 = vmatprep.subr.bf16.mxu0 0
    %980 = vmatpush1.bf16.msra.mxu0 0
    %981 = vmatprep.subr.bf16.mxu0 0
    %982 = vmatpush1.bf16.msra.mxu0 0
    %983 = vmatprep.subr.bf16.mxu0 0
    %984 = vmatpush1.bf16.msra.mxu0 0
    %985 = vmatprep.subr.bf16.mxu0 0
    %986 = vmatpush1.bf16.msra.mxu0 0
    %987 = vmatprep.subr.bf16.mxu0 0
    %988 = vmatpush1.bf16.msra.mxu0 0
    %989 = vmatprep.subr.bf16.mxu0 0
    %990 = vmatpush1.bf16.msra.mxu0 0
    %991 = vmatprep.subr.bf16.mxu0 0
    %992 = vmatpush1.bf16.msra.mxu0 0
    %993 = vmatprep.subr.bf16.mxu0 0
    %994 = vmatpush1.bf16.msra.mxu0 0
    %995 = vmatprep.subr.bf16.mxu0 0
    %996 = vmatpush1.bf16.msra.mxu0 0
    %997 = vmatprep.subr.bf16.mxu0 0
    %998 = vmatpush1.bf16.msra.mxu0 0
    %999 = vmatprep.subr.bf16.mxu0 0
    %1000 = vmatpush1.bf16.msra.mxu0 0
    %1001 = vmatprep.subr.bf16.mxu0 0
    %1002 = vmatpush1.bf16.msra.mxu0 0
    %1003 = vmatprep.mubr.bf16.mxu0 0
    %1004 = vmatmul.mubr.bf16.gmra.mrb[0].mxu0 %v969
    %v1005 = vpop.f32.mrb[0].mxu0
    %v1006 = vadd.f32 %v605, %v1005
    %v1007 = vpop.f32.mrb[0].mxu0
    %v1008 = vpop.f32.mrb[0].mxu0
    %v1009 = vpop.f32.mrb[0].mxu0
    %1010 = vdwg.mxu0
    %vm1011 = vcmp.gt.f32.partialorder %v1006, 0.0
    %v1012 = vmul.f32 %v1006, 0.01
    %v1013 = vsel %vm1011, %v1006, %v1012
    %v1014 = vsel %vm174, %v1013, 0.0
    %1015 = vadd.xlane.f32.xlu0 %v1014
    %v1016 = vpop.xlane.xlu0 %1015
    %v1017 = vmul.f32 %v1016, %v178
    %v1018 = vmul.f32 %v1013, %v1013
    %v1019 = vsel %vm174, %v1018, 0.0
    %1020 = vadd.xlane.f32.xlu0 %v1019
    %v1021 = vpop.xlane.xlu0 %1020
    %v1022 = vmul.f32 %v1021, %v178
    %v1023 = vmul.f32 %v1017, %v1017
    %v1024 = vsub.f32 %v1022, %v1023
    %v1025 = vmul.f32 %v1024, 1.032258
    %v1026 = vmax.f32 %v1025, 0.0
    %v1027 = vsub.f32 %v1013, %v1017
    %v1028 = vrsqrt.pop %v1026
    %v1029 = vmul.f32 %v1027, %v1028
    %v1030 = vmul.f32 %v1029, %v590
    %v1031 = vpack.c.bf16 %v1030, %v1030
    %v1033 = vsel %vm528, %v1031, 0
    %1035 = vmatprep.subr.bf16.mxu0 0
    %1036 = vmatpush1.bf16.msra.mxu0 %v729
    %1037 = vmatprep.subr.bf16.mxu0 0
    %1038 = vmatpush1.bf16.msra.mxu0 %v730
    %1039 = vmatprep.subr.bf16.mxu0 0
    %1040 = vmatpush1.bf16.msra.mxu0 0
    %1041 = vmatprep.subr.bf16.mxu0 0
    %1042 = vmatpush1.bf16.msra.mxu0 0
    %1043 = vmatprep.subr.bf16.mxu0 0
    %1044 = vmatpush1.bf16.msra.mxu0 0
    %1045 = vmatprep.subr.bf16.mxu0 0
    %1046 = vmatpush1.bf16.msra.mxu0 0
    %1047 = vmatprep.subr.bf16.mxu0 0
    %1048 = vmatpush1.bf16.msra.mxu0 0
    %1049 = vmatprep.subr.bf16.mxu0 0
    %1050 = vmatpush1.bf16.msra.mxu0 0
    %1051 = vmatprep.subr.bf16.mxu0 0
    %1052 = vmatpush1.bf16.msra.mxu0 0
    %1053 = vmatprep.subr.bf16.mxu0 0
    %1054 = vmatpush1.bf16.msra.mxu0 0
    %1055 = vmatprep.subr.bf16.mxu0 0
    %1056 = vmatpush1.bf16.msra.mxu0 0
    %1057 = vmatprep.subr.bf16.mxu0 0
    %1058 = vmatpush1.bf16.msra.mxu0 0
    %1059 = vmatprep.subr.bf16.mxu0 0
    %1060 = vmatpush1.bf16.msra.mxu0 0
    %1061 = vmatprep.subr.bf16.mxu0 0
    %1062 = vmatpush1.bf16.msra.mxu0 0
    %1063 = vmatprep.subr.bf16.mxu0 0
    %1064 = vmatpush1.bf16.msra.mxu0 0
    %1065 = vmatprep.subr.bf16.mxu0 0
    %1066 = vmatpush1.bf16.msra.mxu0 0
    %1067 = vmatprep.mubr.bf16.mxu0 0
    %1068 = vmatmul.mubr.bf16.gmra.mrb[0].mxu0 %v1033
    %v1069 = vpop.f32.mrb[0].mxu0
    %v1070 = vadd.f32 %v736, %v1069
    %v1071 = vpop.f32.mrb[0].mxu0
    %v1072 = vpop.f32.mrb[0].mxu0
    %v1073 = vpop.f32.mrb[0].mxu0
    %1074 = vdwg.mxu0
    %v1075 = vmax.f32 %v1070, 0.0
    %v1076 = vsel %vm174, %v1075, 0.0
    %1077 = vadd.xlane.f32.xlu0 %v1076
    %v1078 = vpop.xlane.xlu0 %1077
    %v1079 = vmul.f32 %v1078, %v178
    %v1080 = vmul.f32 %v1075, %v1075
    %v1081 = vsel %vm174, %v1080, 0.0
    %1082 = vadd.xlane.f32.xlu0 %v1081
    %v1083 = vpop.xlane.xlu0 %1082
    %v1084 = vmul.f32 %v1083, %v178
    %v1085 = vmul.f32 %v1079, %v1079
    %v1086 = vsub.f32 %v1084, %v1085
    %v1087 = vmul.f32 %v1086, 1.032258
    %v1088 = vmax.f32 %v1087, 0.0
    %v1089 = vsub.f32 %v1075, %v1079
    %v1090 = vrsqrt.pop %v1088
    %v1091 = vmul.f32 %v1089, %v1090
    %v1092 = vld [vmem:[%s18] sm:$0xff]
    %v1093 = vld [vmem:[%s18 + $0x8] sm:$0xff]
    %v1100 = vcombine.low %v435, %v436
    %v1101 = vcombine.low %v437, %v438
    %v1103 = vunpack.c.l.s4 1983009808
    %v1104 = vunpack.c.0.s8 %v1103
    %v1105 = vlaneseq
    %v1106 = vshrl.u32 %v1105, 7
    %v1107 = vsub.s32 %v1104, %v1106
    %v1108 = vrot.slane %v1100, %v1107
    %v1110 = vunpack.c.l.s4 1983009808
    %v1111 = vunpack.c.0.s8 %v1110
    %v1112 = vlaneseq
    %v1113 = vshrl.u32 %v1112, 7
    %v1114 = vsub.s32 %v1111, %v1113
    %v1115 = vrot.slane %v1101, %v1114
    %v1116 = vcombine.low %v1108, %v1115
    %v1117 = vcombine.low %v439, %v440
    %v1119 = vunpack.c.l.s4 1983009808
    %v1120 = vunpack.c.0.s8 %v1119
    %v1121 = vlaneseq
    %v1122 = vshrl.u32 %v1121, 7
    %v1123 = vsub.s32 %v1120, %v1122
    %v1124 = vrot.slane %v1117, %v1123
    %v1127 = vpack.c.bf16 %v1124, %v1116
    %v1128 = vpack.c.bf16 %v1093, %v1092
    %v1129 = vld [vmem:[%s19] sm:$0x1]
    %v1131 = vlaneseq
    %v1132 = vshrl.u32 %v1131, 7
    %v1133 = vsub.s32 0, %v1132
    %v1134 = vrot.slane %v1129, %v1133
    %v1137 = vsel %vm261, %v1127, 0
    %1139 = vmatprep.subr.bf16.mxu0 0
    %1140 = vmatpush1.bf16.msra.mxu0 %v1128
    %1141 = vmatprep.subr.bf16.mxu0 0
    %1142 = vmatpush1.bf16.msra.mxu0 0
    %1143 = vmatprep.subr.bf16.mxu0 0
    %1144 = vmatpush1.bf16.msra.mxu0 0
    %1145 = vmatprep.subr.bf16.mxu0 0
    %1146 = vmatpush1.bf16.msra.mxu0 0
    %1147 = vmatprep.subr.bf16.mxu0 0
    %1148 = vmatpush1.bf16.msra.mxu0 0
    %1149 = vmatprep.subr.bf16.mxu0 0
    %1150 = vmatpush1.bf16.msra.mxu0 0
    %1151 = vmatprep.subr.bf16.mxu0 0
    %1152 = vmatpush1.bf16.msra.mxu0 0
    %1153 = vmatprep.subr.bf16.mxu0 0
    %1154 = vmatpush1.bf16.msra.mxu0 0
    %1155 = vmatprep.subr.bf16.mxu0 0
    %1156 = vmatpush1.bf16.msra.mxu0 0
    %1157 = vmatprep.subr.bf16.mxu0 0
    %1158 = vmatpush1.bf16.msra.mxu0 0
    %1159 = vmatprep.subr.bf16.mxu0 0
    %1160 = vmatpush1.bf16.msra.mxu0 0
    %1161 = vmatprep.subr.bf16.mxu0 0
    %1162 = vmatpush1.bf16.msra.mxu0 0
    %1163 = vmatprep.subr.bf16.mxu0 0
    %1164 = vmatpush1.bf16.msra.mxu0 0
    %1165 = vmatprep.subr.bf16.mxu0 0
    %1166 = vmatpush1.bf16.msra.mxu0 0
    %1167 = vmatprep.subr.bf16.mxu0 0
    %1168 = vmatpush1.bf16.msra.mxu0 0
    %1169 = vmatprep.subr.bf16.mxu0 0
    %1170 = vmatpush1.bf16.msra.mxu0 0
    %1171 = vmatprep.mubr.bf16.mxu0 0
    %1172 = vmatmul.mubr.bf16.gmra.mrb[0].mxu0 %v1137
    %v1173 = vpop.f32.mrb[0].mxu0
    %v1174 = vadd.f32 %v1134, %v1173
    %v1175 = vpop.f32.mrb[0].mxu0
    %v1176 = vpop.f32.mrb[0].mxu0
    %v1177 = vadd.f32 %v1134, %v1176
    %v1178 = vpop.f32.mrb[0].mxu0
    %1179 = vdwg.mxu0
    %v1180 = vmax.f32 %v1174, 0.0
    %v1181 = vmax.f32 %v1177, 0.0
    %v1182 = vsel %vm528, %v1180, 0.0
    %1183 = vadd.xlane.f32.xlu0 %v1182
    %v1184 = vpop.xlane.xlu0 %1183
    %vm1185 = vcmask 257024
    %v1186 = vsel %vm1185, %v1181, 0.0
    %1187 = vadd.xlane.f32.xlu0 %v1186
    %v1188 = vpop.xlane.xlu0 %1187
    %v1189 = vmul.f32 %v1184, %v178
    %v1190 = vmul.f32 %v1188, %v178
    %v1191 = vmul.f32 %v1180, %v1180
    %v1192 = vmul.f32 %v1181, %v1181
    %v1193 = vsel %vm528, %v1191, 0.0
    %1194 = vadd.xlane.f32.xlu0 %v1193
    %v1195 = vpop.xlane.xlu0 %1194
    %v1196 = vsel %vm1185, %v1192, 0.0
    %1197 = vadd.xlane.f32.xlu0 %v1196
    %v1198 = vpop.xlane.xlu0 %1197
    %v1199 = vmul.f32 %v1195, %v178
    %v1200 = vmul.f32 %v1198, %v178
    %v1201 = vmul.f32 %v1189, %v1189
    %v1202 = vmul.f32 %v1190, %v1190
    %v1203 = vsub.f32 %v1199, %v1201
    %v1204 = vsub.f32 %v1200, %v1202
    %v1205 = vmul.f32 %v1203, 1.032258
    %v1206 = vmul.f32 %v1204, 1.032258
    %v1207 = vmax.f32 %v1205, 0.0
    %v1208 = vmax.f32 %v1206, 0.0
    %v1209 = vsub.f32 %v1180, %v1189
    %v1210 = vsub.f32 %v1181, %v1190
    %v1211 = vrsqrt.pop %v1207
    %v1212 = vrsqrt.pop %v1208
    %v1213 = vmul.f32 %v1209, %v1211
    %v1214 = vmul.f32 %v1210, %v1212
    %v1216 = vrot.slane %v1091, 1
    %v1219 = vmul.f32 %v959, %v1091
    %v1220 = vmul.f32 %v966, %v1216
    %v1223 = vcombine.high %v1213, %v1213
    %v1225 = vunpack.c.l.s4 1983009808
    %v1226 = vunpack.c.0.s8 %v1225
    %v1227 = vlaneseq
    %v1228 = vshrl.u32 %v1227, 7
    %v1229 = vsub.s32 %v1226, %v1228
    %v1230 = vrot.slane %v1213, %v1229
    %v1232 = vunpack.c.l.s4 1983009808
    %v1233 = vunpack.c.0.s8 %v1232
    %v1234 = vlaneseq
    %v1235 = vshrl.u32 %v1234, 7
    %v1236 = vsub.s32 %v1233, %v1235
    %v1237 = vrot.slane %v1223, %v1236
    %v1238 = vcombine.high %v1230, %v1230
    %v1239 = vcombine.high %v1237, %v1237
    %v1241 = vunpack.c.l.s4 1983009808
    %v1242 = vunpack.c.0.s8 %v1241
    %v1243 = vlaneseq
    %v1244 = vshrl.u32 %v1243, 7
    %v1245 = vsub.s32 %v1242, %v1244
    %v1246 = vrot.slane %v1214, %v1245
    %v1247 = vcombine.high %v1246, %v1246
    %v1254 = vlaneseq
    %v1255 = vshrl.u32 %v1254, 7
    %v1256 = vsub.s32 0, %v1255
    %v1257 = vrot.slane %v1219, %v1256
    %v1258 = vlaneseq
    %v1259 = vshrl.u32 %v1258, 7
    %v1260 = vsub.s32 0, %v1259
    %v1261 = vrot.slane %v1220, %v1260
    %v1264 = vcombine.high %v1257, %v1257
    %v1266 = vunpack.c.l.s4 1983009808
    %v1267 = vunpack.c.0.s8 %v1266
    %v1268 = vlaneseq
    %v1269 = vshrl.u32 %v1268, 7
    %v1270 = vsub.s32 %v1267, %v1269
    %v1271 = vrot.slane %v1257, %v1270
    %v1273 = vunpack.c.l.s4 1983009808
    %v1274 = vunpack.c.0.s8 %v1273
    %v1275 = vlaneseq
    %v1276 = vshrl.u32 %v1275, 7
    %v1277 = vsub.s32 %v1274, %v1276
    %v1278 = vrot.slane %v1264, %v1277
    %v1279 = vcombine.high %v1271, %v1271
    %v1280 = vcombine.high %v1261, %v1261
    %v1282 = vunpack.c.l.s4 1983009808
    %v1283 = vunpack.c.0.s8 %v1282
    %v1284 = vlaneseq
    %v1285 = vshrl.u32 %v1284, 7
    %v1286 = vsub.s32 %v1283, %v1285
    %v1287 = vrot.slane %v1261, %v1286
    %v1289 = vunpack.c.l.s4 1983009808
    %v1290 = vunpack.c.0.s8 %v1289
    %v1291 = vlaneseq
    %v1292 = vshrl.u32 %v1291, 7
    %v1293 = vsub.s32 %v1290, %v1292
    %v1294 = vrot.slane %v1280, %v1293
    %v1295 = vcombine.high %v1287, %v1287
    %v1302 = vmul.f32 %v1230, %v1271
    %v1303 = vmul.f32 %v1238, %v1279
    %v1304 = vmul.f32 %v1237, %v1278
    %v1305 = vmul.f32 %v1239, %v1287
    %v1306 = vmul.f32 %v1246, %v1295
    %v1307 = vmul.f32 %v1247, %v1294
    %v1314 = vcombine.low %v1302, %v1303
    %v1316 = vunpack.c.l.s4 1983009808
    %v1317 = vunpack.c.0.s8 %v1316
    %v1318 = vlaneseq
    %v1319 = vshrl.u32 %v1318, 7
    %v1320 = vsub.s32 %v1317, %v1319
    %v1321 = vrot.slane %v1314, %v1320
    %v1323 = vunpack.c.l.s4 1983009808
    %v1324 = vunpack.c.0.s8 %v1323
    %v1325 = vlaneseq
    %v1326 = vshrl.u32 %v1325, 7
    %v1327 = vsub.s32 %v1324, %v1326
    %v1328 = vrot.slane %v1304, %v1327
    %v1329 = vcombine.low %v1321, %v1328
    %v1330 = vcombine.low %v1305, %v1306
    %v1332 = vunpack.c.l.s4 1983009808
    %v1333 = vunpack.c.0.s8 %v1332
    %v1334 = vlaneseq
    %v1335 = vshrl.u32 %v1334, 7
    %v1336 = vsub.s32 %v1333, %v1335
    %v1337 = vrot.slane %v1330, %v1336
    %v1339 = vunpack.c.l.s4 1983009808
    %v1340 = vunpack.c.0.s8 %v1339
    %v1341 = vlaneseq
    %v1342 = vshrl.u32 %v1341, 7
    %v1343 = vsub.s32 %v1340, %v1342
    %v1344 = vrot.slane %v1307, %v1343
    %v1345 = vcombine.low %v1337, %v1344
    %vm1348 = vcmask 259072
    %v1349 = vsel %vm1348, %v1329, 0.0
    %1350 = vadd.xlane.f32.xlu0 %v1349
    %v1351 = vpop.xlane.xlu0 %1350
    %v1352 = vsel %vm1348, %v1345, 0.0
    %1353 = vadd.xlane.f32.xlu0 %v1352
    %v1354 = vpop.xlane.xlu0 %1353
    %v1357 = vlaneseq
    %v1358 = vshrl.u32 %v1357, 7
    %v1359 = vsub.s32 %v912, %v1358
    %v1360 = vrot.slane %v1351, %v1359
    %v1361 = vlaneseq
    %v1362 = vshrl.u32 %v1361, 7
    %v1363 = vsub.s32 %v912, %v1362
    %v1364 = vrot.slane %v1354, %v1363
    %v1365 = vsel %vm921, %v1364, %v1360
    %vm1367 = vcmask 41984
    %1368 = vst.msk [vmem:[#allocation6] sm:$0x3] %vm1367, %v1365
    // Predicated region
    $region78: #{tpu_custom_call.1} parent=1 // pred_check
      _
    $region79: #{tpu_custom_call.1} parent=1 // pred_check_branch
      %1370 = sbr.rel (0) target = $region81
    $region80: #{tpu_custom_call.1} parent=1 // pred_region
      %s1372 = ssub.s32 32, 32
      %1373 = vsyncadd [#allocation7], %s1372
      %s1375 = sshll.u32 [#allocation6], 4
      %s1376 = int_to_ptr.vmem [resolvable:$true] %s1375
      %1378 = dma.vmem_to_hbm [thread:$0]  %s1376, 32, %s20, [#allocation7]
    $region81: #{tpu_custom_call.1} parent=1 // pred_fallthru
      _
    // Predicated region
    $region82: #{tpu_custom_call.1} parent=1 // pred_check
      _
    $region83: #{tpu_custom_call.1} parent=1 // pred_check_branch
      %1380 = sbr.rel (0) target = $region85
    $region84: #{tpu_custom_call.1} parent=1 // pred_region
      %1381 = dma.done [#allocation7], 32
    $region85: #{tpu_custom_call.1} parent=1 // pred_fallthru
      _
    %1382 = vsyncpa [#allocation7], 1

</llo_original>
